<compile_context>
chip_gen: v7x
topology: tpu7x:2x2x1
jax: 0.10.0
libtpu: 0.0.40
codegen_flags: <defaults>
</compile_context>

<pallas_src>
import functools

import jax
import jax.numpy as jnp
from jax import lax
from jax.experimental import pallas as pl
from jax.experimental.pallas import tpu as pltpu


def _round_up(x: int, m: int) -> int:
    return ((x + m - 1) // m) * m


def _attn_kernel(q_ref, k_ref, v_ref, o_ref, *scratch, scale, kv_len, block_k,
                 kv_padded, single_kv_step, exact_div):
    """One (head-group, q-tile, kv-tile) step of attention.

    Block shapes:
      q_ref        : (G, tq, D)   input dtype
      k_ref, v_ref : (G, tk, D)   input dtype
      o_ref        : (tq, G*D)    input dtype (lane-dense packed heads)
    scratch (only present when single_kv_step is False):
      qs_ref       : (G, tq, D)   input dtype (pre-scaled q, staged once/q-tile)
      m_ref, l_ref : (G, tq, 1)   f32 (running max / running sum)
      acc_ref      : (G, tq, D)   f32 (running numerator)
    """
    G, _, D = q_ref.shape

    def _qk(qv):
        # (G,tq,D) x (G,tk,D) -> (G,tq,tk): contract head_dim of both operands
        # (no k transpose), batch over grouped heads, f32 MXU accumulation.
        return lax.dot_general(
            qv, k_ref[...],
            dimension_numbers=(((2,), (2,)), ((0,), (0,))),
            preferred_element_type=jnp.float32)

    def _pv(p):
        # (G,tq,tk) x (G,tk,D) -> (G,tq,D), p cast back to the MXU-native dtype.
        return lax.dot_general(
            p.astype(v_ref.dtype), v_ref[...],
            dimension_numbers=(((2,), (1,)), ((0,), (0,))),
            preferred_element_type=jnp.float32)

    def _store(acc, l):
        # Normalize once (outside the kv loop) and pack the G heads into the
        # lane-dense (tq, G*D) output block.
        if exact_div:
            inv = 1.0 / l                              # exact on the f32 path
        else:
            inv = pl.reciprocal(l, approx=True)        # EUP, otherwise idle
        out = (acc * inv).astype(o_ref.dtype)          # (G, tq, D)
        for g in range(G):                             # static unroll
            o_ref[:, g * D:(g + 1) * D] = out[g]

    if single_kv_step:
        # All keys fit in one block: plain softmax, no scratch traffic, no
        # online rescales. This is the hot LightGlue path (N <= 768).
        q = q_ref[...] * jnp.asarray(scale, dtype=q_ref.dtype)
        s = _qk(q)                                     # (G, tq, tk) f32
        m = jnp.max(s, axis=-1, keepdims=True)
        p = jnp.exp(s - m)
        l = jnp.sum(p, axis=-1, keepdims=True)
        _store(_pv(p), l)
        return

    qs_ref, m_ref, l_ref, acc_ref = scratch
    ki = pl.program_id(2)

    @pl.when(ki == 0)
    def _init():
        # Fold 1/sqrt(D) into q once per q tile (the q block is identical for
        # every kv step), instead of re-multiplying on each step.
        qs_ref[...] = q_ref[...] * jnp.asarray(scale, dtype=q_ref.dtype)
        m_ref[...] = jnp.full(m_ref.shape, -jnp.inf, jnp.float32)
        l_ref[...] = jnp.zeros(l_ref.shape, jnp.float32)
        acc_ref[...] = jnp.zeros(acc_ref.shape, jnp.float32)

    s = _qk(qs_ref[...])                               # (G, tq, tk) f32

    # Online softmax update.
    m_prev = m_ref[...]
    m_new = jnp.maximum(m_prev, jnp.max(s, axis=-1, keepdims=True))
    alpha = jnp.exp(m_prev - m_new)                    # (G, tq, 1) f32
    p = jnp.exp(s - m_new)                             # (G, tq, tk) f32
    row_sum = jnp.sum(p, axis=-1, keepdims=True)
    if kv_padded:
        # Padded keys/values are zero (wrapper pads with jnp.pad), so their
        # scores are exactly 0.0 in f32 and they contribute nothing to p @ v.
        # Their only effect is an excess contribution to the softmax
        # denominator. All padded columns share one p value, and the tile's
        # last column is padding whenever n_pad > 0, so a scalar correction
        # removes them — no (G,tq,tk) iota/compare/select on any kv step.
        n_pad = jnp.maximum((ki + 1) * block_k - kv_len, 0).astype(jnp.float32)
        row_sum = row_sum - n_pad * p[:, :, block_k - 1:block_k]
    l_ref[...] = alpha * l_ref[...] + row_sum
    acc_ref[...] = alpha * acc_ref[...] + _pv(p)
    m_ref[...] = m_new

    @pl.when(ki == pl.num_programs(2) - 1)
    def _finalize():
        _store(acc_ref[...], l_ref[...])


def attention(q, k, v):
    """Scaled dot-product attention matching Attention.forward.

    q: [B, H, Nq, D], k/v: [B, H, Nk, D] (any float dtype). Returns q's
    shape/dtype: [B, H, Nq, D].
    """
    assert q.ndim == 4 and k.ndim == 4 and v.ndim == 4
    B, H, Nq, D = q.shape
    assert k.shape[:2] == (B, H) and k.shape[3] == D and v.shape == k.shape
    Nk = k.shape[2]
    scale = float(D) ** -0.5
    BH = B * H

    SINGLE = 768        # full-extent single block up to this sequence length
    TQ, TK = 256, 512   # tile sizes on the tiled (long-sequence) path

    # q tiling: full-extent block (no pad, no output slice) when Nq is small.
    if Nq <= SINGLE:
        tq, Npq = Nq, Nq
    else:
        tq, Npq = TQ, _round_up(Nq, TQ)
    n_q = Npq // tq

    # kv tiling: full-extent block (no pad, no mask) when Nk is small.
    if Nk <= SINGLE:
        tk, Npk = Nk, Nk
    else:
        tk, Npk = TK, _round_up(Nk, TK)
    n_k = Npk // tk
    kv_padded = (Npk != Nk)
    single_kv_step = (n_k == 1)

    # Head grouping: pack G heads per grid step so the packed output block is
    # lane-dense (G*D >= 128), while keeping >= 2 parallel grid steps so both
    # TensorCores stay busy on v7x megacore. (G batching does not enlarge the
    # individual MXU ops — D=64 underfills them regardless — it exists for the
    # lane-dense store and per-step overhead amortization.)
    target_g = min(8, max(1, -(-128 // max(D, 1))))       # ceil(128 / D)
    cands = [g for g in range(min(target_g, BH), 0, -1) if BH % g == 0]
    G = cands[0]
    for g in cands:
        if (BH // g) * n_q >= 2:
            G = g
            break
    GD = G * D
    BHg = BH // G

    qf = q.reshape(BH, Nq, D)
    kf = k.reshape(BH, Nk, D)
    vf = v.reshape(BH, Nk, D)
    if Npq != Nq:
        qf = jnp.pad(qf, ((0, 0), (0, Npq - Nq), (0, 0)))
    if kv_padded:
        pad = ((0, 0), (0, Npk - Nk), (0, 0))
        kf = jnp.pad(kf, pad)   # zero keys   -> padded scores are exactly 0
        vf = jnp.pad(vf, pad)   # zero values -> no contribution to p @ v

    q_spec = pl.BlockSpec((G, tq, D), lambda b, qi, ki: (b, qi, 0))
    kv_spec = pl.BlockSpec((G, tk, D), lambda b, qi, ki: (b, ki, 0))
    o_spec = pl.BlockSpec((None, tq, GD), lambda b, qi, ki: (b, qi, 0))

    scratch = []
    if not single_kv_step:
        scratch = [
            pltpu.VMEM((G, tq, D), q.dtype),       # staged pre-scaled q
            pltpu.VMEM((G, tq, 1), jnp.float32),   # running max m
            pltpu.VMEM((G, tq, 1), jnp.float32),   # running sum l
            pltpu.VMEM((G, tq, D), jnp.float32),   # f32 accumulator
        ]

    kernel = functools.partial(
        _attn_kernel, scale=scale, kv_len=Nk, block_k=tk,
        kv_padded=kv_padded, single_kv_step=single_kv_step,
        exact_div=(q.dtype == jnp.float32))

    out = pl.pallas_call(
        kernel,
        out_shape=jax.ShapeDtypeStruct((BHg, Npq, GD), q.dtype),
        grid_spec=pltpu.PrefetchScalarGridSpec(
            num_scalar_prefetch=0,
            grid=(BHg, n_q, n_k),
            in_specs=[q_spec, kv_spec, kv_spec],
            out_specs=o_spec,
            scratch_shapes=scratch,
        ),
        compiler_params=pltpu.CompilerParams(
            dimension_semantics=("parallel", "parallel", "arbitrary"),
            vmem_limit_bytes=32 * 1024 * 1024,
        ),
    )(qf, kf, vf)

    # Un-pack the G heads from the lane-dense (Npq, G*D) slabs back to
    # (B, H, Nq, D) with a cheap wrapper transpose/reshape.
    out = out.reshape(BHg, Npq, G, D).transpose(0, 2, 1, 3).reshape(B, H, Npq, D)
    if Npq != Nq:
        out = out[:, :, :Nq, :]
    return out


def _reference(q, k, v):
    qf, kf, vf = (x.astype(jnp.float32) for x in (q, k, v))
    s = jnp.einsum("...id,...jd->...ij", qf, kf) * (q.shape[-1] ** -0.5)
    p = jax.nn.softmax(s, axis=-1)
    return jnp.einsum("...ij,...jd->...id", p, vf)


if __name__ == "__main__":
    key = jax.random.PRNGKey(0)
    kq, kk, kv_ = jax.random.split(key, 3)

    # LightGlue-style heads: B=2, H=4, N=256, D=64 (head_dim).
    B, H, N, D = 2, 4, 256, 64
    q = jax.random.normal(kq, (B, H, N, D), jnp.float32)
    k = jax.random.normal(kk, (B, H, N, D), jnp.float32)
    v = jax.random.normal(kv_, (B, H, N, D), jnp.float32)

    # 1) f32, aligned N -> single-block fast path, lane-dense packed store.
    out = attention(q, k, v)
    jax.block_until_ready(out)
    ref = _reference(q, k, v)
    assert out.shape == (B, H, N, D) and out.dtype == q.dtype
    assert jnp.allclose(out, ref, atol=2e-3, rtol=2e-3), float(
        jnp.max(jnp.abs(out - ref)))

    # 2) ragged small N -> full-extent blocks: no pad, no mask, no slice.
    N2 = 200
    out2 = attention(q[:, :, :N2], k[:, :, :N2], v[:, :, :N2])
    jax.block_until_ready(out2)
    ref2 = _reference(q[:, :, :N2], k[:, :, :N2], v[:, :, :N2])
    assert out2.shape == (B, H, N2, D)
    assert jnp.allclose(out2, ref2, atol=2e-3, rtol=2e-3)

    # 3) cross-attention shape (Nq != Nk), as used by LightGlue cross blocks.
    out3 = attention(q, k[:, :, :N2], v[:, :, :N2])
    jax.block_until_ready(out3)
    ref3 = _reference(q, k[:, :, :N2], v[:, :, :N2])
    assert out3.shape == (B, H, N, D)
    assert jnp.allclose(out3, ref3, atol=2e-3, rtol=2e-3)

    # 4) bf16 operands (MXU-native), f32 softmax statistics inside the kernel.
    qb, kb, vb = (x.astype(jnp.bfloat16) for x in (q, k, v))
    out4 = attention(qb, kb, vb)
    jax.block_until_ready(out4)
    assert out4.dtype == jnp.bfloat16
    assert jnp.allclose(out4.astype(jnp.float32), ref, atol=5e-2, rtol=5e-2)

    # 5) long sequence -> tiled online-softmax path (tq=256, tk=512), no pad.
    N5 = 1024
    q5 = jax.random.normal(kq, (1, 2, N5, D), jnp.float32)
    k5 = jax.random.normal(kk, (1, 2, N5, D), jnp.float32)
    v5 = jax.random.normal(kv_, (1, 2, N5, D), jnp.float32)
    out5 = attention(q5, k5, v5)
    jax.block_until_ready(out5)
    ref5 = _reference(q5, k5, v5)
    assert jnp.allclose(out5, ref5, atol=2e-3, rtol=2e-3)

    # 6) long ragged sequence -> zero-pad kv + denominator correction path.
    N6 = 800
    out6 = attention(q5[:, :, :N6], k5[:, :, :N6], v5[:, :, :N6])
    jax.block_until_ready(out6)
    ref6 = _reference(q5[:, :, :N6], k5[:, :, :N6], v5[:, :, :N6])
    assert out6.shape == (1, 2, N6, D)
    assert jnp.allclose(out6, ref6, atol=2e-3, rtol=2e-3)

    print("KERNEL_OK")
</pallas_src>

<mosaic_0001>
module attributes {stable_mosaic.version = 11 : i64} {
  func.func @_attn_kernel(%arg0: i32, %arg1: i32, %arg2: i32, %arg3: memref<2x256x64xf32, #tpu.memory_space<vmem>>, %arg4: memref<2x256x64xf32, #tpu.memory_space<vmem>>, %arg5: memref<2x256x64xf32, #tpu.memory_space<vmem>>, %arg6: memref<1x256x128xf32, #tpu.memory_space<vmem>>) attributes {dimension_semantics = [#tpu.dimension_semantics<parallel>, #tpu.dimension_semantics<parallel>, #tpu.dimension_semantics<arbitrary>], iteration_bounds = array<i64: 4, 1, 1>, scalar_prefetch = 0 : i64, scratch_operands = 0 : i64, tpu.core_type = #tpu.core_type<tc>, window_params = [{transform_indices = @transform_0, window_bounds = array<i64: 2, 256, 64>}, {transform_indices = @transform_1, window_bounds = array<i64: 2, 256, 64>}, {transform_indices = @transform_2, window_bounds = array<i64: 2, 256, 64>}, {transform_indices = @transform_3, window_bounds = array<i64: 1, 256, 128>}]} {
    %c0 = arith.constant 0 : index
    %c0_0 = arith.constant 0 : index
    %c0_1 = arith.constant 0 : index
    %0 = vector.load %arg3[%c0, %c0_0, %c0_1] : memref<2x256x64xf32, #tpu.memory_space<vmem>>, vector<2x256x64xf32>
    %cst = arith.constant 1.250000e-01 : f32
    %1 = vector.broadcast %cst : f32 to vector<2x256x64xf32>
    %2 = arith.mulf %0, %1 : vector<2x256x64xf32>
    %c0_2 = arith.constant 0 : index
    %c0_3 = arith.constant 0 : index
    %c0_4 = arith.constant 0 : index
    %3 = vector.load %arg4[%c0_2, %c0_3, %c0_4] : memref<2x256x64xf32, #tpu.memory_space<vmem>>, vector<2x256x64xf32>
    %cst_5 = arith.constant dense<0.000000e+00> : vector<2x256x256xf32>
    %4 = tpu.matmul %2, %3, %cst_5 {dimension_numbers = #tpu.dot_dimension_numbers<[2], [2], [1], [1], [0, 0, 0, 1, 1, 1], [0], [0]>} : vector<2x256x64xf32>, vector<2x256x64xf32>, vector<2x256x256xf32> -> vector<2x256x256xf32>
    %cst_6 = arith.constant dense<0xFF800000> : vector<2x256xf32>
    %5 = vector.multi_reduction <maximumf>, %4, %cst_6 [2] : vector<2x256x256xf32> to vector<2x256xf32>
    %6 = vector.shape_cast %5 : vector<2x256xf32> to vector<2x256x1xf32>
    %7 = vector.broadcast %6 : vector<2x256x1xf32> to vector<2x256x256xf32>
    %8 = arith.subf %4, %7 : vector<2x256x256xf32>
    %9 = math.exp %8 : vector<2x256x256xf32>
    %cst_7 = arith.constant dense<0.000000e+00> : vector<2x256xf32>
    %10 = vector.multi_reduction <add>, %9, %cst_7 [2] : vector<2x256x256xf32> to vector<2x256xf32>
    %11 = vector.shape_cast %10 : vector<2x256xf32> to vector<2x256x1xf32>
    %c0_8 = arith.constant 0 : index
    %c0_9 = arith.constant 0 : index
    %c0_10 = arith.constant 0 : index
    %12 = vector.load %arg5[%c0_8, %c0_9, %c0_10] : memref<2x256x64xf32, #tpu.memory_space<vmem>>, vector<2x256x64xf32>
    %cst_11 = arith.constant dense<0.000000e+00> : vector<2x256x64xf32>
    %13 = tpu.matmul %9, %12, %cst_11 {dimension_numbers = #tpu.dot_dimension_numbers<[2], [1], [1], [2], [0, 0, 0, 1, 1, 2], [0], [0]>} : vector<2x256x256xf32>, vector<2x256x64xf32>, vector<2x256x64xf32> -> vector<2x256x64xf32>
    %cst_12 = arith.constant 1.000000e+00 : f32
    %14 = vector.broadcast %cst_12 : f32 to vector<2x256x1xf32>
    %15 = arith.divf %14, %11 : vector<2x256x1xf32>
    %16 = vector.broadcast %15 : vector<2x256x1xf32> to vector<2x256x64xf32>
    %17 = arith.mulf %13, %16 : vector<2x256x64xf32>
    %18 = vector.extract_strided_slice %17 {offsets = [0, 0, 0], sizes = [1, 256, 64], strides = [1, 1, 1]} : vector<2x256x64xf32> to vector<1x256x64xf32>
    %19 = vector.shape_cast %18 : vector<1x256x64xf32> to vector<256x64xf32>
    %c0_13 = arith.constant 0 : index
    %c0_14 = arith.constant 0 : index
    %c0_15 = arith.constant 0 : index
    %20 = vector.load %arg6[%c0_13, %c0_14, %c0_15] : memref<1x256x128xf32, #tpu.memory_space<vmem>>, vector<1x256x64xf32>
    %21 = vector.shape_cast %20 : vector<1x256x64xf32> to vector<256x64xf32>
    %22 = vector.shape_cast %19 : vector<256x64xf32> to vector<1x256x64xf32>
    tpu.vector_store %arg6[%c0_13, %c0_14, %c0_15], %22 {strides = array<i32>} : memref<1x256x128xf32, #tpu.memory_space<vmem>>, vector<1x256x64xf32>,
    %23 = vector.extract_strided_slice %17 {offsets = [1, 0, 0], sizes = [1, 256, 64], strides = [1, 1, 1]} : vector<2x256x64xf32> to vector<1x256x64xf32>
    %24 = vector.shape_cast %23 : vector<1x256x64xf32> to vector<256x64xf32>
    %c0_16 = arith.constant 0 : index
    %c0_17 = arith.constant 0 : index
    %c64 = arith.constant 64 : index
    %25 = vector.load %arg6[%c0_16, %c0_17, %c64] : memref<1x256x128xf32, #tpu.memory_space<vmem>>, vector<1x256x64xf32>
    %26 = vector.shape_cast %25 : vector<1x256x64xf32> to vector<256x64xf32>
    %27 = vector.shape_cast %24 : vector<256x64xf32> to vector<1x256x64xf32>
    tpu.vector_store %arg6[%c0_16, %c0_17, %c64], %27 {strides = array<i32>} : memref<1x256x128xf32, #tpu.memory_space<vmem>>, vector<1x256x64xf32>,
    return
  }
  func.func @transform_0(%arg0: i32, %arg1: i32, %arg2: i32) -> (i32, i32, i32) {
    %c0_i32 = arith.constant 0 : i32
    %c0_i32_0 = arith.constant 0 : i32
    return %arg0, %arg1, %c0_i32 : i32, i32, i32
  }
  func.func @transform_1(%arg0: i32, %arg1: i32, %arg2: i32) -> (i32, i32, i32) {
    %c0_i32 = arith.constant 0 : i32
    %c0_i32_0 = arith.constant 0 : i32
    return %arg0, %arg2, %c0_i32 : i32, i32, i32
  }
  func.func @transform_2(%arg0: i32, %arg1: i32, %arg2: i32) -> (i32, i32, i32) {
    %c0_i32 = arith.constant 0 : i32
    %c0_i32_0 = arith.constant 0 : i32
    return %arg0, %arg2, %c0_i32 : i32, i32, i32
  }
  func.func @transform_3(%arg0: i32, %arg1: i32, %arg2: i32) -> (i32, i32, i32) {
    %c0_i32 = arith.constant 0 : i32
    %c0_i32_0 = arith.constant 0 : i32
    return %arg0, %arg1, %c0_i32 : i32, i32, i32
  }
}

</mosaic_0001>

<llo_original>
// kernel: tpu_custom_call.1
$region0: #{tpu_custom_call.1}
  #allocation0 [shape = 'u32[]', space=smem, size = 0x4, offset = 0x4, fixed_abs, tag = 'smem constant byte address 0x4 - core index']
  #allocation1 [shape = 'u32[144,128]{1,0:T(1,128)}', space=vmem, size = 0x12000, scoped, tag = 'internal scratch']
  %s0 = inlined_call_operand.vmem [shape: f32[8,256,64], index: 0, kind: input, shape index: {}]
  %s1 = inlined_call_operand.vmem [shape: f32[8,256,64], index: 1, kind: input, shape index: {}]
  %s2 = inlined_call_operand.vmem [shape: f32[8,256,64], index: 2, kind: input, shape index: {}]
  %s3 = inlined_call_operand.hbm [shape: f32[4,256,128], index: 3, kind: output, shape index: {}]
  %s4 = sld [smem:[#allocation0]]
  $region45: #{tpu_custom_call.1} parent=0
    _
  %s6 = ssub.s32 1, %s4
  %s7 = scalar_select 0, %s6, %s4
  $region1: #{tpu_custom_call.1} parent=0
    #allocation2 [shape = 'u8[262144]{0}', space=vmem, size = 0x40000, scoped, tag = 'output window, operand 0']
    #allocation3 [shape = 's32[2]{0}', space=sflag, size = 0x8, scoped, tag = 'scoped memory for tpu_custom_call.1']
    %8 = vsyncpa [#allocation3], 0
    %s9 = scalar_lea.sflag [#allocation3], 1
    %10 = vsyncpa %s9, 0
    loop: start=0, step=1, limit=6
    $region2: #{tpu_custom_call.1} parent=1 // loop_pre_header
      _
    $region3: #{tpu_custom_call.1} parent=1 // loop_header
      %s12 = sphi 0, %s16
      %p13 = scmp.ge.s32.totalorder %s12, 6
      %s19 = sphi 0, %s38
      %s20 = sphi 0, %s34
      %s21 = sphi 0, %s30
      %s22 = sphi 0, %s19
      %s23 = sphi 0, %s20
      %s24 = sphi 0, %s21
      %s25 = sphi 0, %s22
      %s26 = sphi 0, %s23
      %s27 = sphi 0, %s24
      %s43 = sphi 0, %s45
      %s46 = sphi 0, %s43
      %s47 = sphi 0, %s46
      %s63 = sphi 0, %s47
      %s71 = sphi 0, %s73
      %s74 = sphi 0, %s71
      %s75 = sphi 0, %s74
      %s91 = sphi 0, %s75
      %s99 = sphi 0, %s101
      %s102 = sphi 0, %s99
      %s103 = sphi 0, %s102
      %s119 = sphi 0, %s103
      %s127 = sphi 0, %s129
      %s130 = sphi 0, %s127
      %s131 = sphi 0, %s130
      %s147 = sphi 0, %s131
    $region4: #{tpu_custom_call.1} parent=1 // loop_header_branch
      %15 = sbr.rel (%p13) target = $region8
    $region5: #{tpu_custom_call.1} parent=1 // loop_body
      %s17 = ssub.s32 %s12, 1
      %s18 = ssub.s32 %s12, 2
      %s28 = sadd.s32 1, %s21
      %p29 = scmp.ge.s32.totalorder %s28, 1
      %s30 = scalar_select %p29, 0, %s28
      %s31 = sadd.s32 1, %s20
      %s32 = scalar_select %p29, %s31, %s20
      %p33 = scmp.ge.s32.totalorder %s32, 1
      %s34 = scalar_select %p33, 0, %s32
      %s35 = sadd.s32 1, %s19
      %s36 = scalar_select %p33, %s35, %s19
      %p37 = scmp.ge.s32.totalorder %s36, 4
      %s38 = scalar_select %p37, 0, %s36
      %s39 = ssub.s32 %s19, %s38
      %s40 = ssub.s32 %s20, %s34
      %s41 = sor.u32 %s39, %s40
      %p42 = scmp.eq.s32.totalorder %s41, 0
      %s44 = sadd.s32 %s43, 1
      %s45 = scalar_select %p42, %s43, %s44
      %p48 = pneg %p42
      %p49 = scmp.eq.s32.totalorder %s12, 3
      %p50 = por %p48, %p49
      %p51 = scmp.ne.s32.totalorder %s43, %s46
      %p52 = scmp.eq.s32.totalorder %s12, 0
      %p53 = por %p51, %p52
      %p54 = scmp.ne.s32.totalorder %s43, %s46
      %p55 = scmp.eq.s32.totalorder %s17, 3
      %p56 = por %p54, %p55
      %p57 = scmp.ne.s32.totalorder %s46, %s47
      %p58 = scmp.eq.s32.totalorder %s17, 0
      %p59 = por %p57, %p58
      %p60 = scmp.ne.s32.totalorder %s46, %s47
      %p61 = scmp.eq.s32.totalorder %s18, 3
      %p62 = por %p60, %p61
      %p64 = scmp.ne.s32.totalorder %s47, %s63
      %p65 = scmp.eq.s32.totalorder %s18, 0
      %p66 = por %p64, %p65
      %s67 = ssub.s32 %s19, %s38
      %s68 = ssub.s32 %s21, %s30
      %s69 = sor.u32 %s67, %s68
      %p70 = scmp.eq.s32.totalorder %s69, 0
      %s72 = sadd.s32 %s71, 1
      %s73 = scalar_select %p70, %s71, %s72
      %p76 = pneg %p70
      %p77 = scmp.eq.s32.totalorder %s12, 3
      %p78 = por %p76, %p77
      %p79 = scmp.ne.s32.totalorder %s71, %s74
      %p80 = scmp.eq.s32.totalorder %s12, 0
      %p81 = por %p79, %p80
      %p82 = scmp.ne.s32.totalorder %s71, %s74
      %p83 = scmp.eq.s32.totalorder %s17, 3
      %p84 = por %p82, %p83
      %p85 = scmp.ne.s32.totalorder %s74, %s75
      %p86 = scmp.eq.s32.totalorder %s17, 0
      %p87 = por %p85, %p86
      %p88 = scmp.ne.s32.totalorder %s74, %s75
      %p89 = scmp.eq.s32.totalorder %s18, 3
      %p90 = por %p88, %p89
      %p92 = scmp.ne.s32.totalorder %s75, %s91
      %p93 = scmp.eq.s32.totalorder %s18, 0
      %p94 = por %p92, %p93
      %s95 = ssub.s32 %s19, %s38
      %s96 = ssub.s32 %s21, %s30
      %s97 = sor.u32 %s95, %s96
      %p98 = scmp.eq.s32.totalorder %s97, 0
      %s100 = sadd.s32 %s99, 1
      %s101 = scalar_select %p98, %s99, %s100
      %p104 = pneg %p98
      %p105 = scmp.eq.s32.totalorder %s12, 3
      %p106 = por %p104, %p105
      %p107 = scmp.ne.s32.totalorder %s99, %s102
      %p108 = scmp.eq.s32.totalorder %s12, 0
      %p109 = por %p107, %p108
      %p110 = scmp.ne.s32.totalorder %s99, %s102
      %p111 = scmp.eq.s32.totalorder %s17, 3
      %p112 = por %p110, %p111
      %p113 = scmp.ne.s32.totalorder %s102, %s103
      %p114 = scmp.eq.s32.totalorder %s17, 0
      %p115 = por %p113, %p114
      %p116 = scmp.ne.s32.totalorder %s102, %s103
      %p117 = scmp.eq.s32.totalorder %s18, 3
      %p118 = por %p116, %p117
      %p120 = scmp.ne.s32.totalorder %s103, %s119
      %p121 = scmp.eq.s32.totalorder %s18, 0
      %p122 = por %p120, %p121
      %s123 = ssub.s32 %s19, %s38
      %s124 = ssub.s32 %s20, %s34
      %s125 = sor.u32 %s123, %s124
      %p126 = scmp.eq.s32.totalorder %s125, 0
      %s128 = sadd.s32 %s127, 1
      %s129 = scalar_select %p126, %s127, %s128
      %p132 = pneg %p126
      %p133 = scmp.eq.s32.totalorder %s12, 3
      %p134 = por %p132, %p133
      %p135 = scmp.ne.s32.totalorder %s127, %s130
      %p136 = scmp.eq.s32.totalorder %s12, 0
      %p137 = por %p135, %p136
      %p138 = scmp.ne.s32.totalorder %s127, %s130
      %p139 = scmp.eq.s32.totalorder %s17, 3
      %p140 = por %p138, %p139
      %p141 = scmp.ne.s32.totalorder %s130, %s131
      %p142 = scmp.eq.s32.totalorder %s17, 0
      %p143 = por %p141, %p142
      %p144 = scmp.ne.s32.totalorder %s130, %s131
      %p145 = scmp.eq.s32.totalorder %s18, 3
      %p146 = por %p144, %p145
      %p148 = scmp.ne.s32.totalorder %s131, %s147
      %p149 = scmp.eq.s32.totalorder %s18, 0
      %p150 = por %p148, %p149
      %p151 = scmp.le.s32.totalorder 1, %s12
      %p152 = scmp.lt.s32.totalorder %s12, 5
      %p153 = pnand %p151, %p152
      %p154 = pneg %p153
      // Predicated region
      $region9: #{tpu_custom_call.1} parent=5 // pred_check
        _
      $region10: #{tpu_custom_call.1} parent=5 // pred_check_branch
        %156 = sbr.rel (%p153) target = $region12
      $region11: #{tpu_custom_call.1} parent=5 // pred_region
        %s157 = ssub.s32 %s12, 1
      $region12: #{tpu_custom_call.1} parent=5 // pred_fallthru
        _
      %p158 = scmp.lt.s32.totalorder %s12, 4
      // Predicated region
      $region13: #{tpu_custom_call.1} parent=5 // pred_check
        %p159 = pneg %p158
      $region14: #{tpu_custom_call.1} parent=5 // pred_check_branch
        %161 = sbr.rel (%p159) target = $region16
      $region15: #{tpu_custom_call.1} parent=5 // pred_region
        // Predicated region
        $region17: #{tpu_custom_call.1} parent=15 // pred_check
          %p162 = pneg %p53
        $region18: #{tpu_custom_call.1} parent=15 // pred_check_branch
          %164 = sbr.rel (%p162) target = $region20
        $region19: #{tpu_custom_call.1} parent=15 // pred_region
          %s165 = smul.u32 2, %s19
          %s166 = smul.u32 32, %s20
          %p167 = scmp.lt.s32.totalorder %s165, 7
          %s168 = scalar_select %p167, %s165, 7
          %p169 = scmp.lt.s32.totalorder %s166, 31
          %s170 = scalar_select %p169, %s166, 31
          %s171 = smul.addr %s168, 32
          %s172 = sadd.s32 %s170, %s171
          %s173 = smul.addr %s172, 8
          %s174 = scalar_lea.vmem %s0, %s173
          %s175 = smul.u32 2, %s19
          %s176 = smul.u32 32, %s20
        $region20: #{tpu_custom_call.1} parent=15 // pred_fallthru
          _
        // Predicated region
        $region21: #{tpu_custom_call.1} parent=15 // pred_check
          %p177 = pneg %p81
        $region22: #{tpu_custom_call.1} parent=15 // pred_check_branch
          %179 = sbr.rel (%p177) target = $region24
        $region23: #{tpu_custom_call.1} parent=15 // pred_region
          %s180 = smul.u32 2, %s19
          %s181 = smul.u32 32, %s21
          %p182 = scmp.lt.s32.totalorder %s180, 7
          %s183 = scalar_select %p182, %s180, 7
          %p184 = scmp.lt.s32.totalorder %s181, 31
          %s185 = scalar_select %p184, %s181, 31
          %s186 = smul.addr %s183, 32
          %s187 = sadd.s32 %s185, %s186
          %s188 = smul.addr %s187, 8
          %s189 = scalar_lea.vmem %s1, %s188
          %s190 = smul.u32 2, %s19
          %s191 = smul.u32 32, %s21
        $region24: #{tpu_custom_call.1} parent=15 // pred_fallthru
          _
        // Predicated region
        $region25: #{tpu_custom_call.1} parent=15 // pred_check
          %p192 = pneg %p109
        $region26: #{tpu_custom_call.1} parent=15 // pred_check_branch
          %194 = sbr.rel (%p192) target = $region28
        $region27: #{tpu_custom_call.1} parent=15 // pred_region
          %s195 = smul.u32 2, %s19
          %s196 = smul.u32 32, %s21
          %p197 = scmp.lt.s32.totalorder %s195, 7
          %s198 = scalar_select %p197, %s195, 7
          %p199 = scmp.lt.s32.totalorder %s196, 31
          %s200 = scalar_select %p199, %s196, 31
          %s201 = smul.addr %s198, 32
          %s202 = sadd.s32 %s200, %s201
          %s203 = smul.addr %s202, 8
          %s204 = scalar_lea.vmem %s2, %s203
          %s205 = smul.u32 2, %s19
          %s206 = smul.u32 32, %s21
        $region28: #{tpu_custom_call.1} parent=15 // pred_fallthru
          _
      $region16: #{tpu_custom_call.1} parent=5 // pred_fallthru
        _
      %p207 = scmp.le.s32.totalorder 1, %s12
      %p208 = scmp.lt.s32.totalorder %s12, 5
      %p209 = pnand %p207, %p208
      %p210 = pneg %p209
      // Predicated region
      $region29: #{tpu_custom_call.1} parent=5 // pred_check
        _
      $region30: #{tpu_custom_call.1} parent=5 // pred_check_branch
        %212 = sbr.rel (%p209) target = $region32
      $region31: #{tpu_custom_call.1} parent=5 // pred_region
        %s213 = ssub.s32 %s12, 1
        %s214 = smul.u32 2, %s22
        %s215 = smul.u32 32, %s23
        %p216 = scmp.lt.s32.totalorder %s214, 7
        %s217 = scalar_select %p216, %s214, 7
        %p218 = scmp.lt.s32.totalorder %s215, 31
        %s219 = scalar_select %p218, %s215, 31
        %s220 = smul.addr %s217, 32
        %s221 = sadd.s32 %s219, %s220
        %s222 = smul.addr %s221, 8
        %s223 = scalar_lea.vmem %s0, %s222
        %p224 = pneg %p59
        %p225 = pneg %p56
        %s226 = smul.u32 2, %s22
        %s227 = smul.u32 32, %s24
        %p228 = scmp.lt.s32.totalorder %s226, 7
        %s229 = scalar_select %p228, %s226, 7
        %p230 = scmp.lt.s32.totalorder %s227, 31
        %s231 = scalar_select %p230, %s227, 31
        %s232 = smul.addr %s229, 32
        %s233 = sadd.s32 %s231, %s232
        %s234 = smul.addr %s233, 8
        %s235 = scalar_lea.vmem %s1, %s234
        %p236 = pneg %p87
        %p237 = pneg %p84
        %s238 = smul.u32 2, %s22
        %s239 = smul.u32 32, %s24
        %p240 = scmp.lt.s32.totalorder %s238, 7
        %s241 = scalar_select %p240, %s238, 7
        %p242 = scmp.lt.s32.totalorder %s239, 31
        %s243 = scalar_select %p242, %s239, 31
        %s244 = smul.addr %s241, 32
        %s245 = sadd.s32 %s243, %s244
        %s246 = smul.addr %s245, 8
        %s247 = scalar_lea.vmem %s2, %s246
        %p248 = pneg %p115
        %p249 = pneg %p112
        %p250 = pneg %p143
        %p251 = pneg %p140
        %s252 = sand.u32 %s130, 1
        %s253 = scalar_lea.sflag [#allocation3], %s252
        %s254 = sand.u32 %s130, 1
        %s255 = smul.addr %s254, 256
        %s256 = scalar_lea.vmem [#allocation2], %s255
        %s257 = smul.u32 2, %s22
        %s258 = smul.u32 32, %s23
        %p259 = scmp.lt.s32.totalorder %s257, 7
        %s260 = scalar_select %p259, %s257, 7
        %p261 = scmp.lt.s32.totalorder %s258, 31
        %s262 = scalar_select %p261, %s258, 31
        %s263 = smul.addr %s260, 32
        %s264 = sadd.s32 %s262, %s263
        %s265 = smul.addr %s264, 8
        %s266 = scalar_lea.vmem %s0, %s265
        %s267 = smul.u32 2, %s22
        %s268 = smul.u32 32, %s23
        %s269 = smul.u32 2, %s22
        %s270 = smul.u32 32, %s24
        %p271 = scmp.lt.s32.totalorder %s269, 7
        %s272 = scalar_select %p271, %s269, 7
        %p273 = scmp.lt.s32.totalorder %s270, 31
        %s274 = scalar_select %p273, %s270, 31
        %s275 = smul.addr %s272, 32
        %s276 = sadd.s32 %s274, %s275
        %s277 = smul.addr %s276, 8
        %s278 = scalar_lea.vmem %s1, %s277
        %s279 = smul.u32 2, %s22
        %s280 = smul.u32 32, %s24
        %s281 = smul.u32 2, %s22
        %s282 = smul.u32 32, %s24
        %p283 = scmp.lt.s32.totalorder %s281, 7
        %s284 = scalar_select %p283, %s281, 7
        %p285 = scmp.lt.s32.totalorder %s282, 31
        %s286 = scalar_select %p285, %s282, 31
        %s287 = smul.addr %s284, 32
        %s288 = sadd.s32 %s286, %s287
        %s289 = smul.addr %s288, 8
        %s290 = scalar_lea.vmem %s2, %s289
        %s291 = smul.u32 2, %s22
        %s292 = smul.u32 32, %s24
        %s293 = smul.u32 32, %s23
        %v294 = vld [vmem:[%s266] sm:$0xff]
        %v295 = vld [vmem:[%s266 + $0x8] sm:$0xff]
        %v296 = vld [vmem:[%s266 + $0x10] sm:$0xff]
        %v297 = vld [vmem:[%s266 + $0x18] sm:$0xff]
        %v298 = vld [vmem:[%s266 + $0x20] sm:$0xff]
        %v299 = vld [vmem:[%s266 + $0x28] sm:$0xff]
        %v300 = vld [vmem:[%s266 + $0x30] sm:$0xff]
        %v301 = vld [vmem:[%s266 + $0x38] sm:$0xff]
        %v302 = vld [vmem:[%s266 + $0x40] sm:$0xff]
        %v303 = vld [vmem:[%s266 + $0x48] sm:$0xff]
        %v304 = vld [vmem:[%s266 + $0x50] sm:$0xff]
        %v305 = vld [vmem:[%s266 + $0x58] sm:$0xff]
        %v306 = vld [vmem:[%s266 + $0x60] sm:$0xff]
        %v307 = vld [vmem:[%s266 + $0x68] sm:$0xff]
        %v308 = vld [vmem:[%s266 + $0x70] sm:$0xff]
        %v309 = vld [vmem:[%s266 + $0x78] sm:$0xff]
        %v310 = vld [vmem:[%s266 + $0x80] sm:$0xff]
        %v311 = vld [vmem:[%s266 + $0x88] sm:$0xff]
        %v312 = vld [vmem:[%s266 + $0x90] sm:$0xff]
        %v313 = vld [vmem:[%s266 + $0x98] sm:$0xff]
        %v314 = vld [vmem:[%s266 + $0xa0] sm:$0xff]
        %v315 = vld [vmem:[%s266 + $0xa8] sm:$0xff]
        %v316 = vld [vmem:[%s266 + $0xb0] sm:$0xff]
        %v317 = vld [vmem:[%s266 + $0xb8] sm:$0xff]
        %v318 = vld [vmem:[%s266 + $0xc0] sm:$0xff]
        %v319 = vld [vmem:[%s266 + $0xc8] sm:$0xff]
        %v320 = vld [vmem:[%s266 + $0xd0] sm:$0xff]
        %v321 = vld [vmem:[%s266 + $0xd8] sm:$0xff]
        %v322 = vld [vmem:[%s266 + $0xe0] sm:$0xff]
        %v323 = vld [vmem:[%s266 + $0xe8] sm:$0xff]
        %v324 = vld [vmem:[%s266 + $0xf0] sm:$0xff]
        %v325 = vld [vmem:[%s266 + $0xf8] sm:$0xff]
        %v326 = vld [vmem:[%s266 + $0x100] sm:$0xff]
        %v327 = vld [vmem:[%s266 + $0x108] sm:$0xff]
        %v328 = vld [vmem:[%s266 + $0x110] sm:$0xff]
        %v329 = vld [vmem:[%s266 + $0x118] sm:$0xff]
        %v330 = vld [vmem:[%s266 + $0x120] sm:$0xff]
        %v331 = vld [vmem:[%s266 + $0x128] sm:$0xff]
        %v332 = vld [vmem:[%s266 + $0x130] sm:$0xff]
        %v333 = vld [vmem:[%s266 + $0x138] sm:$0xff]
        %v334 = vld [vmem:[%s266 + $0x140] sm:$0xff]
        %v335 = vld [vmem:[%s266 + $0x148] sm:$0xff]
        %v336 = vld [vmem:[%s266 + $0x150] sm:$0xff]
        %v337 = vld [vmem:[%s266 + $0x158] sm:$0xff]
        %v338 = vld [vmem:[%s266 + $0x160] sm:$0xff]
        %v339 = vld [vmem:[%s266 + $0x168] sm:$0xff]
        %v340 = vld [vmem:[%s266 + $0x170] sm:$0xff]
        %v341 = vld [vmem:[%s266 + $0x178] sm:$0xff]
        %v342 = vld [vmem:[%s266 + $0x180] sm:$0xff]
        %v343 = vld [vmem:[%s266 + $0x188] sm:$0xff]
        %v344 = vld [vmem:[%s266 + $0x190] sm:$0xff]
        %v345 = vld [vmem:[%s266 + $0x198] sm:$0xff]
        %v346 = vld [vmem:[%s266 + $0x1a0] sm:$0xff]
        %v347 = vld [vmem:[%s266 + $0x1a8] sm:$0xff]
        %v348 = vld [vmem:[%s266 + $0x1b0] sm:$0xff]
        %v349 = vld [vmem:[%s266 + $0x1b8] sm:$0xff]
        %v350 = vld [vmem:[%s266 + $0x1c0] sm:$0xff]
        %v351 = vld [vmem:[%s266 + $0x1c8] sm:$0xff]
        %v352 = vld [vmem:[%s266 + $0x1d0] sm:$0xff]
        %v353 = vld [vmem:[%s266 + $0x1d8] sm:$0xff]
        %v354 = vld [vmem:[%s266 + $0x1e0] sm:$0xff]
        %v355 = vld [vmem:[%s266 + $0x1e8] sm:$0xff]
        %v356 = vld [vmem:[%s266 + $0x1f0] sm:$0xff]
        %v357 = vld [vmem:[%s266 + $0x1f8] sm:$0xff]
        %v358 = vmul.f32 %v294, 0.125
        %v359 = vmul.f32 %v295, 0.125
        %v360 = vmul.f32 %v296, 0.125
        %v361 = vmul.f32 %v297, 0.125
        %v362 = vmul.f32 %v298, 0.125
        %v363 = vmul.f32 %v299, 0.125
        %v364 = vmul.f32 %v300, 0.125
        %v365 = vmul.f32 %v301, 0.125
        %v366 = vmul.f32 %v302, 0.125
        %v367 = vmul.f32 %v303, 0.125
        %v368 = vmul.f32 %v304, 0.125
        %v369 = vmul.f32 %v305, 0.125
        %v370 = vmul.f32 %v306, 0.125
        %v371 = vmul.f32 %v307, 0.125
        %v372 = vmul.f32 %v308, 0.125
        %v373 = vmul.f32 %v309, 0.125
        %v374 = vmul.f32 %v310, 0.125
        %v375 = vmul.f32 %v311, 0.125
        %v376 = vmul.f32 %v312, 0.125
        %v377 = vmul.f32 %v313, 0.125
        %v378 = vmul.f32 %v314, 0.125
        %v379 = vmul.f32 %v315, 0.125
        %v380 = vmul.f32 %v316, 0.125
        %v381 = vmul.f32 %v317, 0.125
        %v382 = vmul.f32 %v318, 0.125
        %v383 = vmul.f32 %v319, 0.125
        %v384 = vmul.f32 %v320, 0.125
        %v385 = vmul.f32 %v321, 0.125
        %v386 = vmul.f32 %v322, 0.125
        %v387 = vmul.f32 %v323, 0.125
        %v388 = vmul.f32 %v324, 0.125
        %v389 = vmul.f32 %v325, 0.125
        %v390 = vmul.f32 %v326, 0.125
        %v391 = vmul.f32 %v327, 0.125
        %v392 = vmul.f32 %v328, 0.125
        %v393 = vmul.f32 %v329, 0.125
        %v394 = vmul.f32 %v330, 0.125
        %v395 = vmul.f32 %v331, 0.125
        %v396 = vmul.f32 %v332, 0.125
        %v397 = vmul.f32 %v333, 0.125
        %v398 = vmul.f32 %v334, 0.125
        %v399 = vmul.f32 %v335, 0.125
        %v400 = vmul.f32 %v336, 0.125
        %v401 = vmul.f32 %v337, 0.125
        %v402 = vmul.f32 %v338, 0.125
        %v403 = vmul.f32 %v339, 0.125
        %v404 = vmul.f32 %v340, 0.125
        %v405 = vmul.f32 %v341, 0.125
        %v406 = vmul.f32 %v342, 0.125
        %v407 = vmul.f32 %v343, 0.125
        %v408 = vmul.f32 %v344, 0.125
        %v409 = vmul.f32 %v345, 0.125
        %v410 = vmul.f32 %v346, 0.125
        %v411 = vmul.f32 %v347, 0.125
        %v412 = vmul.f32 %v348, 0.125
        %v413 = vmul.f32 %v349, 0.125
        %v414 = vmul.f32 %v350, 0.125
        %v415 = vmul.f32 %v351, 0.125
        %v416 = vmul.f32 %v352, 0.125
        %v417 = vmul.f32 %v353, 0.125
        %v418 = vmul.f32 %v354, 0.125
        %v419 = vmul.f32 %v355, 0.125
        %v420 = vmul.f32 %v356, 0.125
        %v421 = vmul.f32 %v357, 0.125
        %v422 = vld [vmem:[%s278] sm:$0xff]
        %v423 = vld [vmem:[%s278 + $0x8] sm:$0xff]
        %v424 = vld [vmem:[%s278 + $0x10] sm:$0xff]
        %v425 = vld [vmem:[%s278 + $0x18] sm:$0xff]
        %v426 = vld [vmem:[%s278 + $0x20] sm:$0xff]
        %v427 = vld [vmem:[%s278 + $0x28] sm:$0xff]
        %v428 = vld [vmem:[%s278 + $0x30] sm:$0xff]
        %v429 = vld [vmem:[%s278 + $0x38] sm:$0xff]
        %v430 = vld [vmem:[%s278 + $0x40] sm:$0xff]
        %v431 = vld [vmem:[%s278 + $0x48] sm:$0xff]
        %v432 = vld [vmem:[%s278 + $0x50] sm:$0xff]
        %v433 = vld [vmem:[%s278 + $0x58] sm:$0xff]
        %v434 = vld [vmem:[%s278 + $0x60] sm:$0xff]
        %v435 = vld [vmem:[%s278 + $0x68] sm:$0xff]
        %v436 = vld [vmem:[%s278 + $0x70] sm:$0xff]
        %v437 = vld [vmem:[%s278 + $0x78] sm:$0xff]
        %v438 = vld [vmem:[%s278 + $0x80] sm:$0xff]
        %v439 = vld [vmem:[%s278 + $0x88] sm:$0xff]
        %v440 = vld [vmem:[%s278 + $0x90] sm:$0xff]
        %v441 = vld [vmem:[%s278 + $0x98] sm:$0xff]
        %v442 = vld [vmem:[%s278 + $0xa0] sm:$0xff]
        %v443 = vld [vmem:[%s278 + $0xa8] sm:$0xff]
        %v444 = vld [vmem:[%s278 + $0xb0] sm:$0xff]
        %v445 = vld [vmem:[%s278 + $0xb8] sm:$0xff]
        %v446 = vld [vmem:[%s278 + $0xc0] sm:$0xff]
        %v447 = vld [vmem:[%s278 + $0xc8] sm:$0xff]
        %v448 = vld [vmem:[%s278 + $0xd0] sm:$0xff]
        %v449 = vld [vmem:[%s278 + $0xd8] sm:$0xff]
        %v450 = vld [vmem:[%s278 + $0xe0] sm:$0xff]
        %v451 = vld [vmem:[%s278 + $0xe8] sm:$0xff]
        %v452 = vld [vmem:[%s278 + $0xf0] sm:$0xff]
        %v453 = vld [vmem:[%s278 + $0xf8] sm:$0xff]
        %v454 = vld [vmem:[%s278 + $0x100] sm:$0xff]
        %v455 = vld [vmem:[%s278 + $0x108] sm:$0xff]
        %v456 = vld [vmem:[%s278 + $0x110] sm:$0xff]
        %v457 = vld [vmem:[%s278 + $0x118] sm:$0xff]
        %v458 = vld [vmem:[%s278 + $0x120] sm:$0xff]
        %v459 = vld [vmem:[%s278 + $0x128] sm:$0xff]
        %v460 = vld [vmem:[%s278 + $0x130] sm:$0xff]
        %v461 = vld [vmem:[%s278 + $0x138] sm:$0xff]
        %v462 = vld [vmem:[%s278 + $0x140] sm:$0xff]
        %v463 = vld [vmem:[%s278 + $0x148] sm:$0xff]
        %v464 = vld [vmem:[%s278 + $0x150] sm:$0xff]
        %v465 = vld [vmem:[%s278 + $0x158] sm:$0xff]
        %v466 = vld [vmem:[%s278 + $0x160] sm:$0xff]
        %v467 = vld [vmem:[%s278 + $0x168] sm:$0xff]
        %v468 = vld [vmem:[%s278 + $0x170] sm:$0xff]
        %v469 = vld [vmem:[%s278 + $0x178] sm:$0xff]
        %v470 = vld [vmem:[%s278 + $0x180] sm:$0xff]
        %v471 = vld [vmem:[%s278 + $0x188] sm:$0xff]
        %v472 = vld [vmem:[%s278 + $0x190] sm:$0xff]
        %v473 = vld [vmem:[%s278 + $0x198] sm:$0xff]
        %v474 = vld [vmem:[%s278 + $0x1a0] sm:$0xff]
        %v475 = vld [vmem:[%s278 + $0x1a8] sm:$0xff]
        %v476 = vld [vmem:[%s278 + $0x1b0] sm:$0xff]
        %v477 = vld [vmem:[%s278 + $0x1b8] sm:$0xff]
        %v478 = vld [vmem:[%s278 + $0x1c0] sm:$0xff]
        %v479 = vld [vmem:[%s278 + $0x1c8] sm:$0xff]
        %v480 = vld [vmem:[%s278 + $0x1d0] sm:$0xff]
        %v481 = vld [vmem:[%s278 + $0x1d8] sm:$0xff]
        %v482 = vld [vmem:[%s278 + $0x1e0] sm:$0xff]
        %v483 = vld [vmem:[%s278 + $0x1e8] sm:$0xff]
        %v484 = vld [vmem:[%s278 + $0x1f0] sm:$0xff]
        %v485 = vld [vmem:[%s278 + $0x1f8] sm:$0xff]
        %vm486 = vcmask 523264
        %v488 = vsel %vm486, %v358, 0
        %v491 = vsel %vm486, %v359, 0
        %v494 = vsel %vm486, %v360, 0
        %v497 = vsel %vm486, %v361, 0
        %v500 = vsel %vm486, %v362, 0
        %v503 = vsel %vm486, %v363, 0
        %v506 = vsel %vm486, %v364, 0
        %v509 = vsel %vm486, %v365, 0
        %v512 = vsel %vm486, %v366, 0
        %v515 = vsel %vm486, %v367, 0
        %v518 = vsel %vm486, %v368, 0
        %v521 = vsel %vm486, %v369, 0
        %v524 = vsel %vm486, %v370, 0
        %v527 = vsel %vm486, %v371, 0
        %v530 = vsel %vm486, %v372, 0
        %v533 = vsel %vm486, %v373, 0
        %v536 = vsel %vm486, %v374, 0
        %v539 = vsel %vm486, %v375, 0
        %v542 = vsel %vm486, %v376, 0
        %v545 = vsel %vm486, %v377, 0
        %v548 = vsel %vm486, %v378, 0
        %v551 = vsel %vm486, %v379, 0
        %v554 = vsel %vm486, %v380, 0
        %v557 = vsel %vm486, %v381, 0
        %v560 = vsel %vm486, %v382, 0
        %v563 = vsel %vm486, %v383, 0
        %v566 = vsel %vm486, %v384, 0
        %v569 = vsel %vm486, %v385, 0
        %v572 = vsel %vm486, %v386, 0
        %v575 = vsel %vm486, %v387, 0
        %v578 = vsel %vm486, %v388, 0
        %v581 = vsel %vm486, %v389, 0
        %v584 = vsel %vm486, %v422, 0
        %v587 = vsel %vm486, %v423, 0
        %v590 = vsel %vm486, %v424, 0
        %v593 = vsel %vm486, %v425, 0
        %v596 = vsel %vm486, %v426, 0
        %v599 = vsel %vm486, %v427, 0
        %v602 = vsel %vm486, %v428, 0
        %v605 = vsel %vm486, %v429, 0
        %v608 = vsel %vm486, %v430, 0
        %v611 = vsel %vm486, %v431, 0
        %v614 = vsel %vm486, %v432, 0
        %v617 = vsel %vm486, %v433, 0
        %v620 = vsel %vm486, %v434, 0
        %v623 = vsel %vm486, %v435, 0
        %v626 = vsel %vm486, %v436, 0
        %v629 = vsel %vm486, %v437, 0
        %v632 = vsel %vm486, %v438, 0
        %v635 = vsel %vm486, %v439, 0
        %v638 = vsel %vm486, %v440, 0
        %v641 = vsel %vm486, %v441, 0
        %v644 = vsel %vm486, %v442, 0
        %v647 = vsel %vm486, %v443, 0
        %v650 = vsel %vm486, %v444, 0
        %v653 = vsel %vm486, %v445, 0
        %v656 = vsel %vm486, %v446, 0
        %v659 = vsel %vm486, %v447, 0
        %v662 = vsel %vm486, %v448, 0
        %v665 = vsel %vm486, %v449, 0
        %v668 = vsel %vm486, %v450, 0
        %v671 = vsel %vm486, %v451, 0
        %v674 = vsel %vm486, %v452, 0
        %v677 = vsel %vm486, %v453, 0
        %679 = vmatprep.subr.mxu0 0.0
        %680 = vmatpush1.xpose.msra.mxu0 %v584
        %681 = vmatprep.subr.mxu0 0.0
        %682 = vmatpush1.xpose.msra.mxu0 %v587
        %683 = vmatprep.subr.mxu0 0.0
        %684 = vmatpush1.xpose.msra.mxu0 %v590
        %685 = vmatprep.subr.mxu0 0.0
        %686 = vmatpush1.xpose.msra.mxu0 %v593
        %687 = vmatprep.subr.mxu0 0.0
        %688 = vmatpush1.xpose.msra.mxu0 %v596
        %689 = vmatprep.subr.mxu0 0.0
        %690 = vmatpush1.xpose.msra.mxu0 %v599
        %691 = vmatprep.subr.mxu0 0.0
        %692 = vmatpush1.xpose.msra.mxu0 %v602
        %693 = vmatprep.subr.mxu0 0.0
        %694 = vmatpush1.xpose.msra.mxu0 %v605
        %695 = vmatprep.subr.mxu0 0.0
        %696 = vmatpush1.xpose.msra.mxu0 %v608
        %697 = vmatprep.subr.mxu0 0.0
        %698 = vmatpush1.xpose.msra.mxu0 %v611
        %699 = vmatprep.subr.mxu0 0.0
        %700 = vmatpush1.xpose.msra.mxu0 %v614
        %701 = vmatprep.subr.mxu0 0.0
        %702 = vmatpush1.xpose.msra.mxu0 %v617
        %703 = vmatprep.subr.mxu0 0.0
        %704 = vmatpush1.xpose.msra.mxu0 %v620
        %705 = vmatprep.subr.mxu0 0.0
        %706 = vmatpush1.xpose.msra.mxu0 %v623
        %707 = vmatprep.subr.mxu0 0.0
        %708 = vmatpush1.xpose.msra.mxu0 %v626
        %709 = vmatprep.subr.mxu0 0.0
        %710 = vmatpush1.xpose.msra.mxu0 %v629
        %711 = vmatprep.subr.mxu0 0.0
        %712 = vmatpush1.xpose.msra.mxu0 %v632
        %713 = vmatprep.subr.mxu0 0.0
        %714 = vmatpush1.xpose.msra.mxu0 %v635
        %715 = vmatprep.subr.mxu0 0.0
        %716 = vmatpush1.xpose.msra.mxu0 %v638
        %717 = vmatprep.subr.mxu0 0.0
        %718 = vmatpush1.xpose.msra.mxu0 %v641
        %719 = vmatprep.subr.mxu0 0.0
        %720 = vmatpush1.xpose.msra.mxu0 %v644
        %721 = vmatprep.subr.mxu0 0.0
        %722 = vmatpush1.xpose.msra.mxu0 %v647
        %723 = vmatprep.subr.mxu0 0.0
        %724 = vmatpush1.xpose.msra.mxu0 %v650
        %725 = vmatprep.subr.mxu0 0.0
        %726 = vmatpush1.xpose.msra.mxu0 %v653
        %727 = vmatprep.subr.mxu0 0.0
        %728 = vmatpush1.xpose.msra.mxu0 %v656
        %729 = vmatprep.subr.mxu0 0.0
        %730 = vmatpush1.xpose.msra.mxu0 %v659
        %731 = vmatprep.subr.mxu0 0.0
        %732 = vmatpush1.xpose.msra.mxu0 %v662
        %733 = vmatprep.subr.mxu0 0.0
        %734 = vmatpush1.xpose.msra.mxu0 %v665
        %735 = vmatprep.subr.mxu0 0.0
        %736 = vmatpush1.xpose.msra.mxu0 %v668
        %737 = vmatprep.subr.mxu0 0.0
        %738 = vmatpush1.xpose.msra.mxu0 %v671
        %739 = vmatprep.subr.mxu0 0.0
        %740 = vmatpush1.xpose.msra.mxu0 %v674
        %741 = vmatprep.subr.mxu0 0.0
        %742 = vmatpush1.xpose.msra.mxu0 %v677
        %743 = vmatprep.mubr.f32.mxu0 0.0
        %744 = vmatmul.mubr.f32.gmra.mrb[0].mxu0 %v488
        %v745 = vpop.f32.mrb[0].mxu0
        %v746 = vadd.f32 0.0, %v745
        %v747 = vpop.f32.mrb[0].mxu0
        %v748 = vadd.f32 0.0, %v747
        %749 = vmatprep.mubr.f32.mxu0 0.0
        %750 = vmatmul.mubr.f32.gmra.mrb[0].mxu0 %v491
        %v751 = vpop.f32.mrb[0].mxu0
        %v752 = vadd.f32 0.0, %v751
        %v753 = vpop.f32.mrb[0].mxu0
        %v754 = vadd.f32 0.0, %v753
        %755 = vmatprep.mubr.f32.mxu0 0.0
        %756 = vmatmul.mubr.f32.gmra.mrb[0].mxu0 %v494
        %v757 = vpop.f32.mrb[0].mxu0
        %v758 = vadd.f32 0.0, %v757
        %v759 = vpop.f32.mrb[0].mxu0
        %v760 = vadd.f32 0.0, %v759
        %761 = vmatprep.mubr.f32.mxu0 0.0
        %762 = vmatmul.mubr.f32.gmra.mrb[0].mxu0 %v497
        %v763 = vpop.f32.mrb[0].mxu0
        %v764 = vadd.f32 0.0, %v763
        %v765 = vpop.f32.mrb[0].mxu0
        %v766 = vadd.f32 0.0, %v765
        %767 = vmatprep.mubr.f32.mxu0 0.0
        %768 = vmatmul.mubr.f32.gmra.mrb[0].mxu0 %v500
        %v769 = vpop.f32.mrb[0].mxu0
        %v770 = vadd.f32 0.0, %v769
        %v771 = vpop.f32.mrb[0].mxu0
        %v772 = vadd.f32 0.0, %v771
        %773 = vmatprep.mubr.f32.mxu0 0.0
        %774 = vmatmul.mubr.f32.gmra.mrb[0].mxu0 %v503
        %v775 = vpop.f32.mrb[0].mxu0
        %v776 = vadd.f32 0.0, %v775
        %v777 = vpop.f32.mrb[0].mxu0
        %v778 = vadd.f32 0.0, %v777
        %779 = vmatprep.mubr.f32.mxu0 0.0
        %780 = vmatmul.mubr.f32.gmra.mrb[0].mxu0 %v506
        %v781 = vpop.f32.mrb[0].mxu0
        %v782 = vadd.f32 0.0, %v781
        %v783 = vpop.f32.mrb[0].mxu0
        %v784 = vadd.f32 0.0, %v783
        %785 = vmatprep.mubr.f32.mxu0 0.0
        %786 = vmatmul.mubr.f32.gmra.mrb[0].mxu0 %v509
        %v787 = vpop.f32.mrb[0].mxu0
        %v788 = vadd.f32 0.0, %v787
        %v789 = vpop.f32.mrb[0].mxu0
        %v790 = vadd.f32 0.0, %v789
        %791 = vmatprep.mubr.f32.mxu0 0.0
        %792 = vmatmul.mubr.f32.gmra.mrb[0].mxu0 %v512
        %v793 = vpop.f32.mrb[0].mxu0
        %v794 = vadd.f32 0.0, %v793
        %v795 = vpop.f32.mrb[0].mxu0
        %v796 = vadd.f32 0.0, %v795
        %797 = vmatprep.mubr.f32.mxu0 0.0
        %798 = vmatmul.mubr.f32.gmra.mrb[0].mxu0 %v515
        %v799 = vpop.f32.mrb[0].mxu0
        %v800 = vadd.f32 0.0, %v799
        %v801 = vpop.f32.mrb[0].mxu0
        %v802 = vadd.f32 0.0, %v801
        %803 = vmatprep.mubr.f32.mxu0 0.0
        %804 = vmatmul.mubr.f32.gmra.mrb[0].mxu0 %v518
        %v805 = vpop.f32.mrb[0].mxu0
        %v806 = vadd.f32 0.0, %v805
        %v807 = vpop.f32.mrb[0].mxu0
        %v808 = vadd.f32 0.0, %v807
        %809 = vmatprep.mubr.f32.mxu0 0.0
        %810 = vmatmul.mubr.f32.gmra.mrb[0].mxu0 %v521
        %v811 = vpop.f32.mrb[0].mxu0
        %v812 = vadd.f32 0.0, %v811
        %v813 = vpop.f32.mrb[0].mxu0
        %v814 = vadd.f32 0.0, %v813
        %815 = vmatprep.mubr.f32.mxu0 0.0
        %816 = vmatmul.mubr.f32.gmra.mrb[0].mxu0 %v524
        %v817 = vpop.f32.mrb[0].mxu0
        %v818 = vadd.f32 0.0, %v817
        %v819 = vpop.f32.mrb[0].mxu0
        %v820 = vadd.f32 0.0, %v819
        %821 = vmatprep.mubr.f32.mxu0 0.0
        %822 = vmatmul.mubr.f32.gmra.mrb[0].mxu0 %v527
        %v823 = vpop.f32.mrb[0].mxu0
        %v824 = vadd.f32 0.0, %v823
        %v825 = vpop.f32.mrb[0].mxu0
        %v826 = vadd.f32 0.0, %v825
        %827 = vmatprep.mubr.f32.mxu0 0.0
        %828 = vmatmul.mubr.f32.gmra.mrb[0].mxu0 %v530
        %v829 = vpop.f32.mrb[0].mxu0
        %v830 = vadd.f32 0.0, %v829
        %v831 = vpop.f32.mrb[0].mxu0
        %v832 = vadd.f32 0.0, %v831
        %833 = vmatprep.mubr.f32.mxu0 0.0
        %834 = vmatmul.mubr.f32.gmra.mrb[0].mxu0 %v533
        %v835 = vpop.f32.mrb[0].mxu0
        %v836 = vadd.f32 0.0, %v835
        %v837 = vpop.f32.mrb[0].mxu0
        %v838 = vadd.f32 0.0, %v837
        %839 = vmatprep.mubr.f32.mxu0 0.0
        %840 = vmatmul.mubr.f32.gmra.mrb[0].mxu0 %v536
        %v841 = vpop.f32.mrb[0].mxu0
        %v842 = vadd.f32 0.0, %v841
        %v843 = vpop.f32.mrb[0].mxu0
        %v844 = vadd.f32 0.0, %v843
        %845 = vmatprep.mubr.f32.mxu0 0.0
        %846 = vmatmul.mubr.f32.gmra.mrb[0].mxu0 %v539
        %v847 = vpop.f32.mrb[0].mxu0
        %v848 = vadd.f32 0.0, %v847
        %v849 = vpop.f32.mrb[0].mxu0
        %v850 = vadd.f32 0.0, %v849
        %851 = vmatprep.mubr.f32.mxu0 0.0
        %852 = vmatmul.mubr.f32.gmra.mrb[0].mxu0 %v542
        %v853 = vpop.f32.mrb[0].mxu0
        %v854 = vadd.f32 0.0, %v853
        %v855 = vpop.f32.mrb[0].mxu0
        %v856 = vadd.f32 0.0, %v855
        %857 = vmatprep.mubr.f32.mxu0 0.0
        %858 = vmatmul.mubr.f32.gmra.mrb[0].mxu0 %v545
        %v859 = vpop.f32.mrb[0].mxu0
        %v860 = vadd.f32 0.0, %v859
        %v861 = vpop.f32.mrb[0].mxu0
        %v862 = vadd.f32 0.0, %v861
        %863 = vmatprep.mubr.f32.mxu0 0.0
        %864 = vmatmul.mubr.f32.gmra.mrb[0].mxu0 %v548
        %v865 = vpop.f32.mrb[0].mxu0
        %v866 = vadd.f32 0.0, %v865
        %v867 = vpop.f32.mrb[0].mxu0
        %v868 = vadd.f32 0.0, %v867
        %869 = vmatprep.mubr.f32.mxu0 0.0
        %870 = vmatmul.mubr.f32.gmra.mrb[0].mxu0 %v551
        %v871 = vpop.f32.mrb[0].mxu0
        %v872 = vadd.f32 0.0, %v871
        %v873 = vpop.f32.mrb[0].mxu0
        %v874 = vadd.f32 0.0, %v873
        %875 = vmatprep.mubr.f32.mxu0 0.0
        %876 = vmatmul.mubr.f32.gmra.mrb[0].mxu0 %v554
        %v877 = vpop.f32.mrb[0].mxu0
        %v878 = vadd.f32 0.0, %v877
        %v879 = vpop.f32.mrb[0].mxu0
        %v880 = vadd.f32 0.0, %v879
        %881 = vmatprep.mubr.f32.mxu0 0.0
        %882 = vmatmul.mubr.f32.gmra.mrb[0].mxu0 %v557
        %v883 = vpop.f32.mrb[0].mxu0
        %v884 = vadd.f32 0.0, %v883
        %v885 = vpop.f32.mrb[0].mxu0
        %v886 = vadd.f32 0.0, %v885
        %887 = vmatprep.mubr.f32.mxu0 0.0
        %888 = vmatmul.mubr.f32.gmra.mrb[0].mxu0 %v560
        %v889 = vpop.f32.mrb[0].mxu0
        %v890 = vadd.f32 0.0, %v889
        %v891 = vpop.f32.mrb[0].mxu0
        %v892 = vadd.f32 0.0, %v891
        %893 = vmatprep.mubr.f32.mxu0 0.0
        %894 = vmatmul.mubr.f32.gmra.mrb[0].mxu0 %v563
        %v895 = vpop.f32.mrb[0].mxu0
        %v896 = vadd.f32 0.0, %v895
        %v897 = vpop.f32.mrb[0].mxu0
        %v898 = vadd.f32 0.0, %v897
        %899 = vmatprep.mubr.f32.mxu0 0.0
        %900 = vmatmul.mubr.f32.gmra.mrb[0].mxu0 %v566
        %v901 = vpop.f32.mrb[0].mxu0
        %v902 = vadd.f32 0.0, %v901
        %v903 = vpop.f32.mrb[0].mxu0
        %v904 = vadd.f32 0.0, %v903
        %905 = vmatprep.mubr.f32.mxu0 0.0
        %906 = vmatmul.mubr.f32.gmra.mrb[0].mxu0 %v569
        %v907 = vpop.f32.mrb[0].mxu0
        %v908 = vadd.f32 0.0, %v907
        %v909 = vpop.f32.mrb[0].mxu0
        %v910 = vadd.f32 0.0, %v909
        %911 = vmatprep.mubr.f32.mxu0 0.0
        %912 = vmatmul.mubr.f32.gmra.mrb[0].mxu0 %v572
        %v913 = vpop.f32.mrb[0].mxu0
        %v914 = vadd.f32 0.0, %v913
        %v915 = vpop.f32.mrb[0].mxu0
        %v916 = vadd.f32 0.0, %v915
        %917 = vmatprep.mubr.f32.mxu0 0.0
        %918 = vmatmul.mubr.f32.gmra.mrb[0].mxu0 %v575
        %v919 = vpop.f32.mrb[0].mxu0
        %v920 = vadd.f32 0.0, %v919
        %v921 = vpop.f32.mrb[0].mxu0
        %v922 = vadd.f32 0.0, %v921
        %923 = vmatprep.mubr.f32.mxu0 0.0
        %924 = vmatmul.mubr.f32.gmra.mrb[0].mxu0 %v578
        %v925 = vpop.f32.mrb[0].mxu0
        %v926 = vadd.f32 0.0, %v925
        %v927 = vpop.f32.mrb[0].mxu0
        %v928 = vadd.f32 0.0, %v927
        %929 = vmatprep.mubr.f32.mxu0 0.0
        %930 = vmatmul.mubr.f32.gmra.mrb[0].mxu0 %v581
        %v931 = vpop.f32.mrb[0].mxu0
        %v932 = vadd.f32 0.0, %v931
        %v933 = vpop.f32.mrb[0].mxu0
        %v934 = vadd.f32 0.0, %v933
        %935 = vdwg.mxu0
        %v937 = vsel %vm486, %v390, 0
        %v940 = vsel %vm486, %v391, 0
        %v943 = vsel %vm486, %v392, 0
        %v946 = vsel %vm486, %v393, 0
        %v949 = vsel %vm486, %v394, 0
        %v952 = vsel %vm486, %v395, 0
        %v955 = vsel %vm486, %v396, 0
        %v958 = vsel %vm486, %v397, 0
        %v961 = vsel %vm486, %v398, 0
        %v964 = vsel %vm486, %v399, 0
        %v967 = vsel %vm486, %v400, 0
        %v970 = vsel %vm486, %v401, 0
        %v973 = vsel %vm486, %v402, 0
        %v976 = vsel %vm486, %v403, 0
        %v979 = vsel %vm486, %v404, 0
        %v982 = vsel %vm486, %v405, 0
        %v985 = vsel %vm486, %v406, 0
        %v988 = vsel %vm486, %v407, 0
        %v991 = vsel %vm486, %v408, 0
        %v994 = vsel %vm486, %v409, 0
        %v997 = vsel %vm486, %v410, 0
        %v1000 = vsel %vm486, %v411, 0
        %v1003 = vsel %vm486, %v412, 0
        %v1006 = vsel %vm486, %v413, 0
        %v1009 = vsel %vm486, %v414, 0
        %v1012 = vsel %vm486, %v415, 0
        %v1015 = vsel %vm486, %v416, 0
        %v1018 = vsel %vm486, %v417, 0
        %v1021 = vsel %vm486, %v418, 0
        %v1024 = vsel %vm486, %v419, 0
        %v1027 = vsel %vm486, %v420, 0
        %v1030 = vsel %vm486, %v421, 0
        %v1033 = vsel %vm486, %v454, 0
        %v1036 = vsel %vm486, %v455, 0
        %v1039 = vsel %vm486, %v456, 0
        %v1042 = vsel %vm486, %v457, 0
        %v1045 = vsel %vm486, %v458, 0
        %v1048 = vsel %vm486, %v459, 0
        %v1051 = vsel %vm486, %v460, 0
        %v1054 = vsel %vm486, %v461, 0
        %v1057 = vsel %vm486, %v462, 0
        %v1060 = vsel %vm486, %v463, 0
        %v1063 = vsel %vm486, %v464, 0
        %v1066 = vsel %vm486, %v465, 0
        %v1069 = vsel %vm486, %v466, 0
        %v1072 = vsel %vm486, %v467, 0
        %v1075 = vsel %vm486, %v468, 0
        %v1078 = vsel %vm486, %v469, 0
        %v1081 = vsel %vm486, %v470, 0
        %v1084 = vsel %vm486, %v471, 0
        %v1087 = vsel %vm486, %v472, 0
        %v1090 = vsel %vm486, %v473, 0
        %v1093 = vsel %vm486, %v474, 0
        %v1096 = vsel %vm486, %v475, 0
        %v1099 = vsel %vm486, %v476, 0
        %v1102 = vsel %vm486, %v477, 0
        %v1105 = vsel %vm486, %v478, 0
        %v1108 = vsel %vm486, %v479, 0
        %v1111 = vsel %vm486, %v480, 0
        %v1114 = vsel %vm486, %v481, 0
        %v1117 = vsel %vm486, %v482, 0
        %v1120 = vsel %vm486, %v483, 0
        %v1123 = vsel %vm486, %v484, 0
        %v1126 = vsel %vm486, %v485, 0
        %1128 = vmatprep.subr.mxu0 0.0
        %1129 = vmatpush1.xpose.msra.mxu0 %v1033
        %1130 = vmatprep.subr.mxu0 0.0
        %1131 = vmatpush1.xpose.msra.mxu0 %v1036
        %1132 = vmatprep.subr.mxu0 0.0
        %1133 = vmatpush1.xpose.msra.mxu0 %v1039
        %1134 = vmatprep.subr.mxu0 0.0
        %1135 = vmatpush1.xpose.msra.mxu0 %v1042
        %1136 = vmatprep.subr.mxu0 0.0
        %1137 = vmatpush1.xpose.msra.mxu0 %v1045
        %1138 = vmatprep.subr.mxu0 0.0
        %1139 = vmatpush1.xpose.msra.mxu0 %v1048
        %1140 = vmatprep.subr.mxu0 0.0
        %1141 = vmatpush1.xpose.msra.mxu0 %v1051
        %1142 = vmatprep.subr.mxu0 0.0
        %1143 = vmatpush1.xpose.msra.mxu0 %v1054
        %1144 = vmatprep.subr.mxu0 0.0
        %1145 = vmatpush1.xpose.msra.mxu0 %v1057
        %1146 = vmatprep.subr.mxu0 0.0
        %1147 = vmatpush1.xpose.msra.mxu0 %v1060
        %1148 = vmatprep.subr.mxu0 0.0
        %1149 = vmatpush1.xpose.msra.mxu0 %v1063
        %1150 = vmatprep.subr.mxu0 0.0
        %1151 = vmatpush1.xpose.msra.mxu0 %v1066
        %1152 = vmatprep.subr.mxu0 0.0
        %1153 = vmatpush1.xpose.msra.mxu0 %v1069
        %1154 = vmatprep.subr.mxu0 0.0
        %1155 = vmatpush1.xpose.msra.mxu0 %v1072
        %1156 = vmatprep.subr.mxu0 0.0
        %1157 = vmatpush1.xpose.msra.mxu0 %v1075
        %1158 = vmatprep.subr.mxu0 0.0
        %1159 = vmatpush1.xpose.msra.mxu0 %v1078
        %1160 = vmatprep.subr.mxu0 0.0
        %1161 = vmatpush1.xpose.msra.mxu0 %v1081
        %1162 = vmatprep.subr.mxu0 0.0
        %1163 = vmatpush1.xpose.msra.mxu0 %v1084
        %1164 = vmatprep.subr.mxu0 0.0
        %1165 = vmatpush1.xpose.msra.mxu0 %v1087
        %1166 = vmatprep.subr.mxu0 0.0
        %1167 = vmatpush1.xpose.msra.mxu0 %v1090
        %1168 = vmatprep.subr.mxu0 0.0
        %1169 = vmatpush1.xpose.msra.mxu0 %v1093
        %1170 = vmatprep.subr.mxu0 0.0
        %1171 = vmatpush1.xpose.msra.mxu0 %v1096
        %1172 = vmatprep.subr.mxu0 0.0
        %1173 = vmatpush1.xpose.msra.mxu0 %v1099
        %1174 = vmatprep.subr.mxu0 0.0
        %1175 = vmatpush1.xpose.msra.mxu0 %v1102
        %1176 = vmatprep.subr.mxu0 0.0
        %1177 = vmatpush1.xpose.msra.mxu0 %v1105
        %1178 = vmatprep.subr.mxu0 0.0
        %1179 = vmatpush1.xpose.msra.mxu0 %v1108
        %1180 = vmatprep.subr.mxu0 0.0
        %1181 = vmatpush1.xpose.msra.mxu0 %v1111
        %1182 = vmatprep.subr.mxu0 0.0
        %1183 = vmatpush1.xpose.msra.mxu0 %v1114
        %1184 = vmatprep.subr.mxu0 0.0
        %1185 = vmatpush1.xpose.msra.mxu0 %v1117
        %1186 = vmatprep.subr.mxu0 0.0
        %1187 = vmatpush1.xpose.msra.mxu0 %v1120
        %1188 = vmatprep.subr.mxu0 0.0
        %1189 = vmatpush1.xpose.msra.mxu0 %v1123
        %1190 = vmatprep.subr.mxu0 0.0
        %1191 = vmatpush1.xpose.msra.mxu0 %v1126
        %1192 = vmatprep.mubr.f32.mxu0 0.0
        %1193 = vmatmul.mubr.f32.gmra.mrb[0].mxu0 %v937
        %v1194 = vpop.f32.mrb[0].mxu0
        %v1195 = vadd.f32 0.0, %v1194
        %v1196 = vpop.f32.mrb[0].mxu0
        %v1197 = vadd.f32 0.0, %v1196
        %1198 = vmatprep.mubr.f32.mxu0 0.0
        %1199 = vmatmul.mubr.f32.gmra.mrb[0].mxu0 %v940
        %v1200 = vpop.f32.mrb[0].mxu0
        %v1201 = vadd.f32 0.0, %v1200
        %v1202 = vpop.f32.mrb[0].mxu0
        %v1203 = vadd.f32 0.0, %v1202
        %1204 = vmatprep.mubr.f32.mxu0 0.0
        %1205 = vmatmul.mubr.f32.gmra.mrb[0].mxu0 %v943
        %v1206 = vpop.f32.mrb[0].mxu0
        %v1207 = vadd.f32 0.0, %v1206
        %v1208 = vpop.f32.mrb[0].mxu0
        %v1209 = vadd.f32 0.0, %v1208
        %1210 = vmatprep.mubr.f32.mxu0 0.0
        %1211 = vmatmul.mubr.f32.gmra.mrb[0].mxu0 %v946
        %v1212 = vpop.f32.mrb[0].mxu0
        %v1213 = vadd.f32 0.0, %v1212
        %v1214 = vpop.f32.mrb[0].mxu0
        %v1215 = vadd.f32 0.0, %v1214
        %1216 = vmatprep.mubr.f32.mxu0 0.0
        %1217 = vmatmul.mubr.f32.gmra.mrb[0].mxu0 %v949
        %v1218 = vpop.f32.mrb[0].mxu0
        %v1219 = vadd.f32 0.0, %v1218
        %v1220 = vpop.f32.mrb[0].mxu0
        %v1221 = vadd.f32 0.0, %v1220
        %1222 = vmatprep.mubr.f32.mxu0 0.0
        %1223 = vmatmul.mubr.f32.gmra.mrb[0].mxu0 %v952
        %v1224 = vpop.f32.mrb[0].mxu0
        %v1225 = vadd.f32 0.0, %v1224
        %v1226 = vpop.f32.mrb[0].mxu0
        %v1227 = vadd.f32 0.0, %v1226
        %1228 = vmatprep.mubr.f32.mxu0 0.0
        %1229 = vmatmul.mubr.f32.gmra.mrb[0].mxu0 %v955
        %v1230 = vpop.f32.mrb[0].mxu0
        %v1231 = vadd.f32 0.0, %v1230
        %v1232 = vpop.f32.mrb[0].mxu0
        %v1233 = vadd.f32 0.0, %v1232
        %1234 = vmatprep.mubr.f32.mxu0 0.0
        %1235 = vmatmul.mubr.f32.gmra.mrb[0].mxu0 %v958
        %v1236 = vpop.f32.mrb[0].mxu0
        %v1237 = vadd.f32 0.0, %v1236
        %v1238 = vpop.f32.mrb[0].mxu0
        %v1239 = vadd.f32 0.0, %v1238
        %1240 = vmatprep.mubr.f32.mxu0 0.0
        %1241 = vmatmul.mubr.f32.gmra.mrb[0].mxu0 %v961
        %v1242 = vpop.f32.mrb[0].mxu0
        %v1243 = vadd.f32 0.0, %v1242
        %v1244 = vpop.f32.mrb[0].mxu0
        %v1245 = vadd.f32 0.0, %v1244
        %1246 = vmatprep.mubr.f32.mxu0 0.0
        %1247 = vmatmul.mubr.f32.gmra.mrb[0].mxu0 %v964
        %v1248 = vpop.f32.mrb[0].mxu0
        %v1249 = vadd.f32 0.0, %v1248
        %v1250 = vpop.f32.mrb[0].mxu0
        %v1251 = vadd.f32 0.0, %v1250
        %1252 = vmatprep.mubr.f32.mxu0 0.0
        %1253 = vmatmul.mubr.f32.gmra.mrb[0].mxu0 %v967
        %v1254 = vpop.f32.mrb[0].mxu0
        %v1255 = vadd.f32 0.0, %v1254
        %v1256 = vpop.f32.mrb[0].mxu0
        %v1257 = vadd.f32 0.0, %v1256
        %1258 = vmatprep.mubr.f32.mxu0 0.0
        %1259 = vmatmul.mubr.f32.gmra.mrb[0].mxu0 %v970
        %v1260 = vpop.f32.mrb[0].mxu0
        %v1261 = vadd.f32 0.0, %v1260
        %v1262 = vpop.f32.mrb[0].mxu0
        %v1263 = vadd.f32 0.0, %v1262
        %1264 = vmatprep.mubr.f32.mxu0 0.0
        %1265 = vmatmul.mubr.f32.gmra.mrb[0].mxu0 %v973
        %v1266 = vpop.f32.mrb[0].mxu0
        %v1267 = vadd.f32 0.0, %v1266
        %v1268 = vpop.f32.mrb[0].mxu0
        %v1269 = vadd.f32 0.0, %v1268
        %1270 = vmatprep.mubr.f32.mxu0 0.0
        %1271 = vmatmul.mubr.f32.gmra.mrb[0].mxu0 %v976
        %v1272 = vpop.f32.mrb[0].mxu0
        %v1273 = vadd.f32 0.0, %v1272
        %v1274 = vpop.f32.mrb[0].mxu0
        %v1275 = vadd.f32 0.0, %v1274
        %1276 = vmatprep.mubr.f32.mxu0 0.0
        %1277 = vmatmul.mubr.f32.gmra.mrb[0].mxu0 %v979
        %v1278 = vpop.f32.mrb[0].mxu0
        %v1279 = vadd.f32 0.0, %v1278
        %v1280 = vpop.f32.mrb[0].mxu0
        %v1281 = vadd.f32 0.0, %v1280
        %1282 = vmatprep.mubr.f32.mxu0 0.0
        %1283 = vmatmul.mubr.f32.gmra.mrb[0].mxu0 %v982
        %v1284 = vpop.f32.mrb[0].mxu0
        %v1285 = vadd.f32 0.0, %v1284
        %v1286 = vpop.f32.mrb[0].mxu0
        %v1287 = vadd.f32 0.0, %v1286
        %1288 = vmatprep.mubr.f32.mxu0 0.0
        %1289 = vmatmul.mubr.f32.gmra.mrb[0].mxu0 %v985
        %v1290 = vpop.f32.mrb[0].mxu0
        %v1291 = vadd.f32 0.0, %v1290
        %v1292 = vpop.f32.mrb[0].mxu0
        %v1293 = vadd.f32 0.0, %v1292
        %1294 = vmatprep.mubr.f32.mxu0 0.0
        %1295 = vmatmul.mubr.f32.gmra.mrb[0].mxu0 %v988
        %v1296 = vpop.f32.mrb[0].mxu0
        %v1297 = vadd.f32 0.0, %v1296
        %v1298 = vpop.f32.mrb[0].mxu0
        %v1299 = vadd.f32 0.0, %v1298
        %1300 = vmatprep.mubr.f32.mxu0 0.0
        %1301 = vmatmul.mubr.f32.gmra.mrb[0].mxu0 %v991
        %v1302 = vpop.f32.mrb[0].mxu0
        %v1303 = vadd.f32 0.0, %v1302
        %v1304 = vpop.f32.mrb[0].mxu0
        %v1305 = vadd.f32 0.0, %v1304
        %1306 = vmatprep.mubr.f32.mxu0 0.0
        %1307 = vmatmul.mubr.f32.gmra.mrb[0].mxu0 %v994
        %v1308 = vpop.f32.mrb[0].mxu0
        %v1309 = vadd.f32 0.0, %v1308
        %v1310 = vpop.f32.mrb[0].mxu0
        %v1311 = vadd.f32 0.0, %v1310
        %1312 = vmatprep.mubr.f32.mxu0 0.0
        %1313 = vmatmul.mubr.f32.gmra.mrb[0].mxu0 %v997
        %v1314 = vpop.f32.mrb[0].mxu0
        %v1315 = vadd.f32 0.0, %v1314
        %v1316 = vpop.f32.mrb[0].mxu0
        %v1317 = vadd.f32 0.0, %v1316
        %1318 = vmatprep.mubr.f32.mxu0 0.0
        %1319 = vmatmul.mubr.f32.gmra.mrb[0].mxu0 %v1000
        %v1320 = vpop.f32.mrb[0].mxu0
        %v1321 = vadd.f32 0.0, %v1320
        %v1322 = vpop.f32.mrb[0].mxu0
        %v1323 = vadd.f32 0.0, %v1322
        %1324 = vmatprep.mubr.f32.mxu0 0.0
        %1325 = vmatmul.mubr.f32.gmra.mrb[0].mxu0 %v1003
        %v1326 = vpop.f32.mrb[0].mxu0
        %v1327 = vadd.f32 0.0, %v1326
        %v1328 = vpop.f32.mrb[0].mxu0
        %v1329 = vadd.f32 0.0, %v1328
        %1330 = vmatprep.mubr.f32.mxu0 0.0
        %1331 = vmatmul.mubr.f32.gmra.mrb[0].mxu0 %v1006
        %v1332 = vpop.f32.mrb[0].mxu0
        %v1333 = vadd.f32 0.0, %v1332
        %v1334 = vpop.f32.mrb[0].mxu0
        %v1335 = vadd.f32 0.0, %v1334
        %1336 = vmatprep.mubr.f32.mxu0 0.0
        %1337 = vmatmul.mubr.f32.gmra.mrb[0].mxu0 %v1009
        %v1338 = vpop.f32.mrb[0].mxu0
        %v1339 = vadd.f32 0.0, %v1338
        %v1340 = vpop.f32.mrb[0].mxu0
        %v1341 = vadd.f32 0.0, %v1340
        %1342 = vmatprep.mubr.f32.mxu0 0.0
        %1343 = vmatmul.mubr.f32.gmra.mrb[0].mxu0 %v1012
        %v1344 = vpop.f32.mrb[0].mxu0
        %v1345 = vadd.f32 0.0, %v1344
        %v1346 = vpop.f32.mrb[0].mxu0
        %v1347 = vadd.f32 0.0, %v1346
        %1348 = vmatprep.mubr.f32.mxu0 0.0
        %1349 = vmatmul.mubr.f32.gmra.mrb[0].mxu0 %v1015
        %v1350 = vpop.f32.mrb[0].mxu0
        %v1351 = vadd.f32 0.0, %v1350
        %v1352 = vpop.f32.mrb[0].mxu0
        %v1353 = vadd.f32 0.0, %v1352
        %1354 = vmatprep.mubr.f32.mxu0 0.0
        %1355 = vmatmul.mubr.f32.gmra.mrb[0].mxu0 %v1018
        %v1356 = vpop.f32.mrb[0].mxu0
        %v1357 = vadd.f32 0.0, %v1356
        %v1358 = vpop.f32.mrb[0].mxu0
        %v1359 = vadd.f32 0.0, %v1358
        %1360 = vmatprep.mubr.f32.mxu0 0.0
        %1361 = vmatmul.mubr.f32.gmra.mrb[0].mxu0 %v1021
        %v1362 = vpop.f32.mrb[0].mxu0
        %v1363 = vadd.f32 0.0, %v1362
        %v1364 = vpop.f32.mrb[0].mxu0
        %v1365 = vadd.f32 0.0, %v1364
        %1366 = vmatprep.mubr.f32.mxu0 0.0
        %1367 = vmatmul.mubr.f32.gmra.mrb[0].mxu0 %v1024
        %v1368 = vpop.f32.mrb[0].mxu0
        %v1369 = vadd.f32 0.0, %v1368
        %v1370 = vpop.f32.mrb[0].mxu0
        %v1371 = vadd.f32 0.0, %v1370
        %1372 = vmatprep.mubr.f32.mxu0 0.0
        %1373 = vmatmul.mubr.f32.gmra.mrb[0].mxu0 %v1027
        %v1374 = vpop.f32.mrb[0].mxu0
        %v1375 = vadd.f32 0.0, %v1374
        %v1376 = vpop.f32.mrb[0].mxu0
        %v1377 = vadd.f32 0.0, %v1376
        %1378 = vmatprep.mubr.f32.mxu0 0.0
        %1379 = vmatmul.mubr.f32.gmra.mrb[0].mxu0 %v1030
        %v1380 = vpop.f32.mrb[0].mxu0
        %v1381 = vadd.f32 0.0, %v1380
        %v1382 = vpop.f32.mrb[0].mxu0
        %v1383 = vadd.f32 0.0, %v1382
        %1384 = vdwg.mxu0
        %v1385 = vmax.f32 %v746, %v748
        %1386 = vmax.xlane.f32.xlu0 %v1385
        %v1387 = vpop.xlane.xlu0 %1386
        %v1388 = vmax.f32 %v752, %v754
        %1389 = vmax.xlane.f32.xlu0 %v1388
        %v1390 = vpop.xlane.xlu0 %1389
        %v1391 = vmax.f32 %v758, %v760
        %1392 = vmax.xlane.f32.xlu0 %v1391
        %v1393 = vpop.xlane.xlu0 %1392
        %v1394 = vmax.f32 %v764, %v766
        %1395 = vmax.xlane.f32.xlu0 %v1394
        %v1396 = vpop.xlane.xlu0 %1395
        %v1397 = vmax.f32 %v770, %v772
        %1398 = vmax.xlane.f32.xlu0 %v1397
        %v1399 = vpop.xlane.xlu0 %1398
        %v1400 = vmax.f32 %v776, %v778
        %1401 = vmax.xlane.f32.xlu0 %v1400
        %v1402 = vpop.xlane.xlu0 %1401
        %v1403 = vmax.f32 %v782, %v784
        %1404 = vmax.xlane.f32.xlu0 %v1403
        %v1405 = vpop.xlane.xlu0 %1404
        %v1406 = vmax.f32 %v788, %v790
        %1407 = vmax.xlane.f32.xlu0 %v1406
        %v1408 = vpop.xlane.xlu0 %1407
        %v1409 = vmax.f32 %v794, %v796
        %1410 = vmax.xlane.f32.xlu0 %v1409
        %v1411 = vpop.xlane.xlu0 %1410
        %v1412 = vmax.f32 %v800, %v802
        %1413 = vmax.xlane.f32.xlu0 %v1412
        %v1414 = vpop.xlane.xlu0 %1413
        %v1415 = vmax.f32 %v806, %v808
        %1416 = vmax.xlane.f32.xlu0 %v1415
        %v1417 = vpop.xlane.xlu0 %1416
        %v1418 = vmax.f32 %v812, %v814
        %1419 = vmax.xlane.f32.xlu0 %v1418
        %v1420 = vpop.xlane.xlu0 %1419
        %v1421 = vmax.f32 %v818, %v820
        %1422 = vmax.xlane.f32.xlu0 %v1421
        %v1423 = vpop.xlane.xlu0 %1422
        %v1424 = vmax.f32 %v824, %v826
        %1425 = vmax.xlane.f32.xlu0 %v1424
        %v1426 = vpop.xlane.xlu0 %1425
        %v1427 = vmax.f32 %v830, %v832
        %1428 = vmax.xlane.f32.xlu0 %v1427
        %v1429 = vpop.xlane.xlu0 %1428
        %v1430 = vmax.f32 %v836, %v838
        %1431 = vmax.xlane.f32.xlu0 %v1430
        %v1432 = vpop.xlane.xlu0 %1431
        %v1433 = vmax.f32 %v842, %v844
        %1434 = vmax.xlane.f32.xlu0 %v1433
        %v1435 = vpop.xlane.xlu0 %1434
        %v1436 = vmax.f32 %v848, %v850
        %1437 = vmax.xlane.f32.xlu0 %v1436
        %v1438 = vpop.xlane.xlu0 %1437
        %v1439 = vmax.f32 %v854, %v856
        %1440 = vmax.xlane.f32.xlu0 %v1439
        %v1441 = vpop.xlane.xlu0 %1440
        %v1442 = vmax.f32 %v860, %v862
        %1443 = vmax.xlane.f32.xlu0 %v1442
        %v1444 = vpop.xlane.xlu0 %1443
        %v1445 = vmax.f32 %v866, %v868
        %1446 = vmax.xlane.f32.xlu0 %v1445
        %v1447 = vpop.xlane.xlu0 %1446
        %v1448 = vmax.f32 %v872, %v874
        %1449 = vmax.xlane.f32.xlu0 %v1448
        %v1450 = vpop.xlane.xlu0 %1449
        %v1451 = vmax.f32 %v878, %v880
        %1452 = vmax.xlane.f32.xlu0 %v1451
        %v1453 = vpop.xlane.xlu0 %1452
        %v1454 = vmax.f32 %v884, %v886
        %1455 = vmax.xlane.f32.xlu0 %v1454
        %v1456 = vpop.xlane.xlu0 %1455
        %v1457 = vmax.f32 %v890, %v892
        %1458 = vmax.xlane.f32.xlu0 %v1457
        %v1459 = vpop.xlane.xlu0 %1458
        %v1460 = vmax.f32 %v896, %v898
        %1461 = vmax.xlane.f32.xlu0 %v1460
        %v1462 = vpop.xlane.xlu0 %1461
        %v1463 = vmax.f32 %v902, %v904
        %1464 = vmax.xlane.f32.xlu0 %v1463
        %v1465 = vpop.xlane.xlu0 %1464
        %v1466 = vmax.f32 %v908, %v910
        %1467 = vmax.xlane.f32.xlu0 %v1466
        %v1468 = vpop.xlane.xlu0 %1467
        %v1469 = vmax.f32 %v914, %v916
        %1470 = vmax.xlane.f32.xlu0 %v1469
        %v1471 = vpop.xlane.xlu0 %1470
        %v1472 = vmax.f32 %v920, %v922
        %1473 = vmax.xlane.f32.xlu0 %v1472
        %v1474 = vpop.xlane.xlu0 %1473
        %v1475 = vmax.f32 %v926, %v928
        %1476 = vmax.xlane.f32.xlu0 %v1475
        %v1477 = vpop.xlane.xlu0 %1476
        %v1478 = vmax.f32 %v932, %v934
        %1479 = vmax.xlane.f32.xlu0 %v1478
        %v1480 = vpop.xlane.xlu0 %1479
        %v1481 = vmax.f32 %v1195, %v1197
        %1482 = vmax.xlane.f32.xlu0 %v1481
        %v1483 = vpop.xlane.xlu0 %1482
        %v1484 = vmax.f32 %v1201, %v1203
        %1485 = vmax.xlane.f32.xlu0 %v1484
        %v1486 = vpop.xlane.xlu0 %1485
        %v1487 = vmax.f32 %v1207, %v1209
        %1488 = vmax.xlane.f32.xlu0 %v1487
        %v1489 = vpop.xlane.xlu0 %1488
        %v1490 = vmax.f32 %v1213, %v1215
        %1491 = vmax.xlane.f32.xlu0 %v1490
        %v1492 = vpop.xlane.xlu0 %1491
        %v1493 = vmax.f32 %v1219, %v1221
        %1494 = vmax.xlane.f32.xlu0 %v1493
        %v1495 = vpop.xlane.xlu0 %1494
        %v1496 = vmax.f32 %v1225, %v1227
        %1497 = vmax.xlane.f32.xlu0 %v1496
        %v1498 = vpop.xlane.xlu0 %1497
        %v1499 = vmax.f32 %v1231, %v1233
        %1500 = vmax.xlane.f32.xlu0 %v1499
        %v1501 = vpop.xlane.xlu0 %1500
        %v1502 = vmax.f32 %v1237, %v1239
        %1503 = vmax.xlane.f32.xlu0 %v1502
        %v1504 = vpop.xlane.xlu0 %1503
        %v1505 = vmax.f32 %v1243, %v1245
        %1506 = vmax.xlane.f32.xlu0 %v1505
        %v1507 = vpop.xlane.xlu0 %1506
        %v1508 = vmax.f32 %v1249, %v1251
        %1509 = vmax.xlane.f32.xlu0 %v1508
        %v1510 = vpop.xlane.xlu0 %1509
        %v1511 = vmax.f32 %v1255, %v1257
        %1512 = vmax.xlane.f32.xlu0 %v1511
        %v1513 = vpop.xlane.xlu0 %1512
        %v1514 = vmax.f32 %v1261, %v1263
        %1515 = vmax.xlane.f32.xlu0 %v1514
        %v1516 = vpop.xlane.xlu0 %1515
        %v1517 = vmax.f32 %v1267, %v1269
        %1518 = vmax.xlane.f32.xlu0 %v1517
        %v1519 = vpop.xlane.xlu0 %1518
        %v1520 = vmax.f32 %v1273, %v1275
        %1521 = vmax.xlane.f32.xlu0 %v1520
        %v1522 = vpop.xlane.xlu0 %1521
        %v1523 = vmax.f32 %v1279, %v1281
        %1524 = vmax.xlane.f32.xlu0 %v1523
        %v1525 = vpop.xlane.xlu0 %1524
        %v1526 = vmax.f32 %v1285, %v1287
        %1527 = vmax.xlane.f32.xlu0 %v1526
        %v1528 = vpop.xlane.xlu0 %1527
        %v1529 = vmax.f32 %v1291, %v1293
        %1530 = vmax.xlane.f32.xlu0 %v1529
        %v1531 = vpop.xlane.xlu0 %1530
        %v1532 = vmax.f32 %v1297, %v1299
        %1533 = vmax.xlane.f32.xlu0 %v1532
        %v1534 = vpop.xlane.xlu0 %1533
        %v1535 = vmax.f32 %v1303, %v1305
        %1536 = vmax.xlane.f32.xlu0 %v1535
        %v1537 = vpop.xlane.xlu0 %1536
        %v1538 = vmax.f32 %v1309, %v1311
        %1539 = vmax.xlane.f32.xlu0 %v1538
        %v1540 = vpop.xlane.xlu0 %1539
        %v1541 = vmax.f32 %v1315, %v1317
        %1542 = vmax.xlane.f32.xlu0 %v1541
        %v1543 = vpop.xlane.xlu0 %1542
        %v1544 = vmax.f32 %v1321, %v1323
        %1545 = vmax.xlane.f32.xlu0 %v1544
        %v1546 = vpop.xlane.xlu0 %1545
        %v1547 = vmax.f32 %v1327, %v1329
        %1548 = vmax.xlane.f32.xlu0 %v1547
        %v1549 = vpop.xlane.xlu0 %1548
        %v1550 = vmax.f32 %v1333, %v1335
        %1551 = vmax.xlane.f32.xlu0 %v1550
        %v1552 = vpop.xlane.xlu0 %1551
        %v1553 = vmax.f32 %v1339, %v1341
        %1554 = vmax.xlane.f32.xlu0 %v1553
        %v1555 = vpop.xlane.xlu0 %1554
        %v1556 = vmax.f32 %v1345, %v1347
        %1557 = vmax.xlane.f32.xlu0 %v1556
        %v1558 = vpop.xlane.xlu0 %1557
        %v1559 = vmax.f32 %v1351, %v1353
        %1560 = vmax.xlane.f32.xlu0 %v1559
        %v1561 = vpop.xlane.xlu0 %1560
        %v1562 = vmax.f32 %v1357, %v1359
        %1563 = vmax.xlane.f32.xlu0 %v1562
        %v1564 = vpop.xlane.xlu0 %1563
        %v1565 = vmax.f32 %v1363, %v1365
        %1566 = vmax.xlane.f32.xlu0 %v1565
        %v1567 = vpop.xlane.xlu0 %1566
        %v1568 = vmax.f32 %v1369, %v1371
        %1569 = vmax.xlane.f32.xlu0 %v1568
        %v1570 = vpop.xlane.xlu0 %1569
        %v1571 = vmax.f32 %v1375, %v1377
        %1572 = vmax.xlane.f32.xlu0 %v1571
        %v1573 = vpop.xlane.xlu0 %1572
        %v1574 = vmax.f32 %v1381, %v1383
        %1575 = vmax.xlane.f32.xlu0 %v1574
        %v1576 = vpop.xlane.xlu0 %1575
        %v1577 = vsub.f32 %v746, %v1387
        %v1578 = vsub.f32 %v748, %v1387
        %v1579 = vsub.f32 %v752, %v1390
        %v1580 = vsub.f32 %v754, %v1390
        %v1581 = vsub.f32 %v758, %v1393
        %v1582 = vsub.f32 %v760, %v1393
        %v1583 = vsub.f32 %v764, %v1396
        %v1584 = vsub.f32 %v766, %v1396
        %v1585 = vsub.f32 %v770, %v1399
        %v1586 = vsub.f32 %v772, %v1399
        %v1587 = vsub.f32 %v776, %v1402
        %v1588 = vsub.f32 %v778, %v1402
        %v1589 = vsub.f32 %v782, %v1405
        %v1590 = vsub.f32 %v784, %v1405
        %v1591 = vsub.f32 %v788, %v1408
        %v1592 = vsub.f32 %v790, %v1408
        %v1593 = vsub.f32 %v794, %v1411
        %v1594 = vsub.f32 %v796, %v1411
        %v1595 = vsub.f32 %v800, %v1414
        %v1596 = vsub.f32 %v802, %v1414
        %v1597 = vsub.f32 %v806, %v1417
        %v1598 = vsub.f32 %v808, %v1417
        %v1599 = vsub.f32 %v812, %v1420
        %v1600 = vsub.f32 %v814, %v1420
        %v1601 = vsub.f32 %v818, %v1423
        %v1602 = vsub.f32 %v820, %v1423
        %v1603 = vsub.f32 %v824, %v1426
        %v1604 = vsub.f32 %v826, %v1426
        %v1605 = vsub.f32 %v830, %v1429
        %v1606 = vsub.f32 %v832, %v1429
        %v1607 = vsub.f32 %v836, %v1432
        %v1608 = vsub.f32 %v838, %v1432
        %v1609 = vsub.f32 %v842, %v1435
        %v1610 = vsub.f32 %v844, %v1435
        %v1611 = vsub.f32 %v848, %v1438
        %v1612 = vsub.f32 %v850, %v1438
        %v1613 = vsub.f32 %v854, %v1441
        %v1614 = vsub.f32 %v856, %v1441
        %v1615 = vsub.f32 %v860, %v1444
        %v1616 = vsub.f32 %v862, %v1444
        %v1617 = vsub.f32 %v866, %v1447
        %v1618 = vsub.f32 %v868, %v1447
        %v1619 = vsub.f32 %v872, %v1450
        %v1620 = vsub.f32 %v874, %v1450
        %v1621 = vsub.f32 %v878, %v1453
        %v1622 = vsub.f32 %v880, %v1453
        %v1623 = vsub.f32 %v884, %v1456
        %v1624 = vsub.f32 %v886, %v1456
        %v1625 = vsub.f32 %v890, %v1459
        %v1626 = vsub.f32 %v892, %v1459
        %v1627 = vsub.f32 %v896, %v1462
        %v1628 = vsub.f32 %v898, %v1462
        %v1629 = vsub.f32 %v902, %v1465
        %v1630 = vsub.f32 %v904, %v1465
        %v1631 = vsub.f32 %v908, %v1468
        %v1632 = vsub.f32 %v910, %v1468
        %v1633 = vsub.f32 %v914, %v1471
        %v1634 = vsub.f32 %v916, %v1471
        %v1635 = vsub.f32 %v920, %v1474
        %v1636 = vsub.f32 %v922, %v1474
        %v1637 = vsub.f32 %v926, %v1477
        %v1638 = vsub.f32 %v928, %v1477
        %v1639 = vsub.f32 %v932, %v1480
        %v1640 = vsub.f32 %v934, %v1480
        %v1641 = vsub.f32 %v1195, %v1483
        %v1642 = vsub.f32 %v1197, %v1483
        %v1643 = vsub.f32 %v1201, %v1486
        %v1644 = vsub.f32 %v1203, %v1486
        %v1645 = vsub.f32 %v1207, %v1489
        %v1646 = vsub.f32 %v1209, %v1489
        %v1647 = vsub.f32 %v1213, %v1492
        %v1648 = vsub.f32 %v1215, %v1492
        %v1649 = vsub.f32 %v1219, %v1495
        %v1650 = vsub.f32 %v1221, %v1495
        %v1651 = vsub.f32 %v1225, %v1498
        %v1652 = vsub.f32 %v1227, %v1498
        %v1653 = vsub.f32 %v1231, %v1501
        %v1654 = vsub.f32 %v1233, %v1501
        %v1655 = vsub.f32 %v1237, %v1504
        %v1656 = vsub.f32 %v1239, %v1504
        %v1657 = vsub.f32 %v1243, %v1507
        %v1658 = vsub.f32 %v1245, %v1507
        %v1659 = vsub.f32 %v1249, %v1510
        %v1660 = vsub.f32 %v1251, %v1510
        %v1661 = vsub.f32 %v1255, %v1513
        %v1662 = vsub.f32 %v1257, %v1513
        %v1663 = vsub.f32 %v1261, %v1516
        %v1664 = vsub.f32 %v1263, %v1516
        %v1665 = vsub.f32 %v1267, %v1519
        %v1666 = vsub.f32 %v1269, %v1519
        %v1667 = vsub.f32 %v1273, %v1522
        %v1668 = vsub.f32 %v1275, %v1522
        %v1669 = vsub.f32 %v1279, %v1525
        %v1670 = vsub.f32 %v1281, %v1525
        %v1671 = vsub.f32 %v1285, %v1528
        %v1672 = vsub.f32 %v1287, %v1528
        %v1673 = vsub.f32 %v1291, %v1531
        %v1674 = vsub.f32 %v1293, %v1531
        %v1675 = vsub.f32 %v1297, %v1534
        %v1676 = vsub.f32 %v1299, %v1534
        %v1677 = vsub.f32 %v1303, %v1537
        %v1678 = vsub.f32 %v1305, %v1537
        %v1679 = vsub.f32 %v1309, %v1540
        %v1680 = vsub.f32 %v1311, %v1540
        %v1681 = vsub.f32 %v1315, %v1543
        %v1682 = vsub.f32 %v1317, %v1543
        %v1683 = vsub.f32 %v1321, %v1546
        %v1684 = vsub.f32 %v1323, %v1546
        %v1685 = vsub.f32 %v1327, %v1549
        %v1686 = vsub.f32 %v1329, %v1549
        %v1687 = vsub.f32 %v1333, %v1552
        %v1688 = vsub.f32 %v1335, %v1552
        %v1689 = vsub.f32 %v1339, %v1555
        %v1690 = vsub.f32 %v1341, %v1555
        %v1691 = vsub.f32 %v1345, %v1558
        %v1692 = vsub.f32 %v1347, %v1558
        %v1693 = vsub.f32 %v1351, %v1561
        %v1694 = vsub.f32 %v1353, %v1561
        %v1695 = vsub.f32 %v1357, %v1564
        %v1696 = vsub.f32 %v1359, %v1564
        %v1697 = vsub.f32 %v1363, %v1567
        %v1698 = vsub.f32 %v1365, %v1567
        %v1699 = vsub.f32 %v1369, %v1570
        %v1700 = vsub.f32 %v1371, %v1570
        %v1701 = vsub.f32 %v1375, %v1573
        %v1702 = vsub.f32 %v1377, %v1573
        %v1703 = vsub.f32 %v1381, %v1576
        %v1704 = vsub.f32 %v1383, %v1576
        %v1705 = vmul.f32 %v1577, 1.442695
        %v1706 = vpow.pop %v1705
        %v1707 = vmul.f32 %v1578, 1.442695
        %v1708 = vpow.pop %v1707
        %v1709 = vmul.f32 %v1579, 1.442695
        %v1710 = vpow.pop %v1709
        %v1711 = vmul.f32 %v1580, 1.442695
        %v1712 = vpow.pop %v1711
        %v1713 = vmul.f32 %v1581, 1.442695
        %v1714 = vpow.pop %v1713
        %v1715 = vmul.f32 %v1582, 1.442695
        %v1716 = vpow.pop %v1715
        %v1717 = vmul.f32 %v1583, 1.442695
        %v1718 = vpow.pop %v1717
        %v1719 = vmul.f32 %v1584, 1.442695
        %v1720 = vpow.pop %v1719
        %v1721 = vmul.f32 %v1585, 1.442695
        %v1722 = vpow.pop %v1721
        %v1723 = vmul.f32 %v1586, 1.442695
        %v1724 = vpow.pop %v1723
        %v1725 = vmul.f32 %v1587, 1.442695
        %v1726 = vpow.pop %v1725
        %v1727 = vmul.f32 %v1588, 1.442695
        %v1728 = vpow.pop %v1727
        %v1729 = vmul.f32 %v1589, 1.442695
        %v1730 = vpow.pop %v1729
        %v1731 = vmul.f32 %v1590, 1.442695
        %v1732 = vpow.pop %v1731
        %v1733 = vmul.f32 %v1591, 1.442695
        %v1734 = vpow.pop %v1733
        %v1735 = vmul.f32 %v1592, 1.442695
        %v1736 = vpow.pop %v1735
        %v1737 = vmul.f32 %v1593, 1.442695
        %v1738 = vpow.pop %v1737
        %v1739 = vmul.f32 %v1594, 1.442695
        %v1740 = vpow.pop %v1739
        %v1741 = vmul.f32 %v1595, 1.442695
        %v1742 = vpow.pop %v1741
        %v1743 = vmul.f32 %v1596, 1.442695
        %v1744 = vpow.pop %v1743
        %v1745 = vmul.f32 %v1597, 1.442695
        %v1746 = vpow.pop %v1745
        %v1747 = vmul.f32 %v1598, 1.442695
        %v1748 = vpow.pop %v1747
        %v1749 = vmul.f32 %v1599, 1.442695
        %v1750 = vpow.pop %v1749
        %v1751 = vmul.f32 %v1600, 1.442695
        %v1752 = vpow.pop %v1751
        %v1753 = vmul.f32 %v1601, 1.442695
        %v1754 = vpow.pop %v1753
        %v1755 = vmul.f32 %v1602, 1.442695
        %v1756 = vpow.pop %v1755
        %v1757 = vmul.f32 %v1603, 1.442695
        %v1758 = vpow.pop %v1757
        %v1759 = vmul.f32 %v1604, 1.442695
        %v1760 = vpow.pop %v1759
        %v1761 = vmul.f32 %v1605, 1.442695
        %v1762 = vpow.pop %v1761
        %v1763 = vmul.f32 %v1606, 1.442695
        %v1764 = vpow.pop %v1763
        %v1765 = vmul.f32 %v1607, 1.442695
        %v1766 = vpow.pop %v1765
        %v1767 = vmul.f32 %v1608, 1.442695
        %v1768 = vpow.pop %v1767
        %v1769 = vmul.f32 %v1609, 1.442695
        %v1770 = vpow.pop %v1769
        %v1771 = vmul.f32 %v1610, 1.442695
        %v1772 = vpow.pop %v1771
        %v1773 = vmul.f32 %v1611, 1.442695
        %v1774 = vpow.pop %v1773
        %v1775 = vmul.f32 %v1612, 1.442695
        %v1776 = vpow.pop %v1775
        %v1777 = vmul.f32 %v1613, 1.442695
        %v1778 = vpow.pop %v1777
        %v1779 = vmul.f32 %v1614, 1.442695
        %v1780 = vpow.pop %v1779
        %v1781 = vmul.f32 %v1615, 1.442695
        %v1782 = vpow.pop %v1781
        %v1783 = vmul.f32 %v1616, 1.442695
        %v1784 = vpow.pop %v1783
        %v1785 = vmul.f32 %v1617, 1.442695
        %v1786 = vpow.pop %v1785
        %v1787 = vmul.f32 %v1618, 1.442695
        %v1788 = vpow.pop %v1787
        %v1789 = vmul.f32 %v1619, 1.442695
        %v1790 = vpow.pop %v1789
        %v1791 = vmul.f32 %v1620, 1.442695
        %v1792 = vpow.pop %v1791
        %v1793 = vmul.f32 %v1621, 1.442695
        %v1794 = vpow.pop %v1793
        %v1795 = vmul.f32 %v1622, 1.442695
        %v1796 = vpow.pop %v1795
        %v1797 = vmul.f32 %v1623, 1.442695
        %v1798 = vpow.pop %v1797
        %v1799 = vmul.f32 %v1624, 1.442695
        %v1800 = vpow.pop %v1799
        %v1801 = vmul.f32 %v1625, 1.442695
        %v1802 = vpow.pop %v1801
        %v1803 = vmul.f32 %v1626, 1.442695
        %v1804 = vpow.pop %v1803
        %v1805 = vmul.f32 %v1627, 1.442695
        %v1806 = vpow.pop %v1805
        %v1807 = vmul.f32 %v1628, 1.442695
        %v1808 = vpow.pop %v1807
        %v1809 = vmul.f32 %v1629, 1.442695
        %v1810 = vpow.pop %v1809
        %v1811 = vmul.f32 %v1630, 1.442695
        %v1812 = vpow.pop %v1811
        %v1813 = vmul.f32 %v1631, 1.442695
        %v1814 = vpow.pop %v1813
        %v1815 = vmul.f32 %v1632, 1.442695
        %v1816 = vpow.pop %v1815
        %v1817 = vmul.f32 %v1633, 1.442695
        %v1818 = vpow.pop %v1817
        %v1819 = vmul.f32 %v1634, 1.442695
        %v1820 = vpow.pop %v1819
        %v1821 = vmul.f32 %v1635, 1.442695
        %v1822 = vpow.pop %v1821
        %v1823 = vmul.f32 %v1636, 1.442695
        %v1824 = vpow.pop %v1823
        %v1825 = vmul.f32 %v1637, 1.442695
        %v1826 = vpow.pop %v1825
        %v1827 = vmul.f32 %v1638, 1.442695
        %v1828 = vpow.pop %v1827
        %v1829 = vmul.f32 %v1639, 1.442695
        %v1830 = vpow.pop %v1829
        %v1831 = vmul.f32 %v1640, 1.442695
        %v1832 = vpow.pop %v1831
        %v1833 = vmul.f32 %v1641, 1.442695
        %v1834 = vpow.pop %v1833
        %v1835 = vmul.f32 %v1642, 1.442695
        %v1836 = vpow.pop %v1835
        %v1837 = vmul.f32 %v1643, 1.442695
        %v1838 = vpow.pop %v1837
        %v1839 = vmul.f32 %v1644, 1.442695
        %v1840 = vpow.pop %v1839
        %v1841 = vmul.f32 %v1645, 1.442695
        %v1842 = vpow.pop %v1841
        %v1843 = vmul.f32 %v1646, 1.442695
        %v1844 = vpow.pop %v1843
        %v1845 = vmul.f32 %v1647, 1.442695
        %v1846 = vpow.pop %v1845
        %v1847 = vmul.f32 %v1648, 1.442695
        %v1848 = vpow.pop %v1847
        %v1849 = vmul.f32 %v1649, 1.442695
        %v1850 = vpow.pop %v1849
        %v1851 = vmul.f32 %v1650, 1.442695
        %v1852 = vpow.pop %v1851
        %v1853 = vmul.f32 %v1651, 1.442695
        %v1854 = vpow.pop %v1853
        %v1855 = vmul.f32 %v1652, 1.442695
        %v1856 = vpow.pop %v1855
        %v1857 = vmul.f32 %v1653, 1.442695
        %v1858 = vpow.pop %v1857
        %v1859 = vmul.f32 %v1654, 1.442695
        %v1860 = vpow.pop %v1859
        %v1861 = vmul.f32 %v1655, 1.442695
        %v1862 = vpow.pop %v1861
        %v1863 = vmul.f32 %v1656, 1.442695
        %v1864 = vpow.pop %v1863
        %v1865 = vmul.f32 %v1657, 1.442695
        %v1866 = vpow.pop %v1865
        %v1867 = vmul.f32 %v1658, 1.442695
        %v1868 = vpow.pop %v1867
        %v1869 = vmul.f32 %v1659, 1.442695
        %v1870 = vpow.pop %v1869
        %v1871 = vmul.f32 %v1660, 1.442695
        %v1872 = vpow.pop %v1871
        %v1873 = vmul.f32 %v1661, 1.442695
        %v1874 = vpow.pop %v1873
        %v1875 = vmul.f32 %v1662, 1.442695
        %v1876 = vpow.pop %v1875
        %v1877 = vmul.f32 %v1663, 1.442695
        %v1878 = vpow.pop %v1877
        %v1879 = vmul.f32 %v1664, 1.442695
        %v1880 = vpow.pop %v1879
        %v1881 = vmul.f32 %v1665, 1.442695
        %v1882 = vpow.pop %v1881
        %v1883 = vmul.f32 %v1666, 1.442695
        %v1884 = vpow.pop %v1883
        %v1885 = vmul.f32 %v1667, 1.442695
        %v1886 = vpow.pop %v1885
        %v1887 = vmul.f32 %v1668, 1.442695
        %v1888 = vpow.pop %v1887
        %v1889 = vmul.f32 %v1669, 1.442695
        %v1890 = vpow.pop %v1889
        %v1891 = vmul.f32 %v1670, 1.442695
        %v1892 = vpow.pop %v1891
        %v1893 = vmul.f32 %v1671, 1.442695
        %v1894 = vpow.pop %v1893
        %v1895 = vmul.f32 %v1672, 1.442695
        %v1896 = vpow.pop %v1895
        %v1897 = vmul.f32 %v1673, 1.442695
        %v1898 = vpow.pop %v1897
        %v1899 = vmul.f32 %v1674, 1.442695
        %v1900 = vpow.pop %v1899
        %v1901 = vmul.f32 %v1675, 1.442695
        %v1902 = vpow.pop %v1901
        %v1903 = vmul.f32 %v1676, 1.442695
        %v1904 = vpow.pop %v1903
        %v1905 = vmul.f32 %v1677, 1.442695
        %v1906 = vpow.pop %v1905
        %v1907 = vmul.f32 %v1678, 1.442695
        %v1908 = vpow.pop %v1907
        %v1909 = vmul.f32 %v1679, 1.442695
        %v1910 = vpow.pop %v1909
        %v1911 = vmul.f32 %v1680, 1.442695
        %v1912 = vpow.pop %v1911
        %v1913 = vmul.f32 %v1681, 1.442695
        %v1914 = vpow.pop %v1913
        %v1915 = vmul.f32 %v1682, 1.442695
        %v1916 = vpow.pop %v1915
        %v1917 = vmul.f32 %v1683, 1.442695
        %v1918 = vpow.pop %v1917
        %v1919 = vmul.f32 %v1684, 1.442695
        %v1920 = vpow.pop %v1919
        %v1921 = vmul.f32 %v1685, 1.442695
        %v1922 = vpow.pop %v1921
        %v1923 = vmul.f32 %v1686, 1.442695
        %v1924 = vpow.pop %v1923
        %v1925 = vmul.f32 %v1687, 1.442695
        %v1926 = vpow.pop %v1925
        %v1927 = vmul.f32 %v1688, 1.442695
        %v1928 = vpow.pop %v1927
        %v1929 = vmul.f32 %v1689, 1.442695
        %v1930 = vpow.pop %v1929
        %v1931 = vmul.f32 %v1690, 1.442695
        %v1932 = vpow.pop %v1931
        %v1933 = vmul.f32 %v1691, 1.442695
        %v1934 = vpow.pop %v1933
        %v1935 = vmul.f32 %v1692, 1.442695
        %v1936 = vpow.pop %v1935
        %v1937 = vmul.f32 %v1693, 1.442695
        %v1938 = vpow.pop %v1937
        %v1939 = vmul.f32 %v1694, 1.442695
        %v1940 = vpow.pop %v1939
        %v1941 = vmul.f32 %v1695, 1.442695
        %v1942 = vpow.pop %v1941
        %v1943 = vmul.f32 %v1696, 1.442695
        %v1944 = vpow.pop %v1943
        %v1945 = vmul.f32 %v1697, 1.442695
        %v1946 = vpow.pop %v1945
        %v1947 = vmul.f32 %v1698, 1.442695
        %v1948 = vpow.pop %v1947
        %v1949 = vmul.f32 %v1699, 1.442695
        %v1950 = vpow.pop %v1949
        %v1951 = vmul.f32 %v1700, 1.442695
        %v1952 = vpow.pop %v1951
        %v1953 = vmul.f32 %v1701, 1.442695
        %v1954 = vpow.pop %v1953
        %v1955 = vmul.f32 %v1702, 1.442695
        %v1956 = vpow.pop %v1955
        %v1957 = vmul.f32 %v1703, 1.442695
        %v1958 = vpow.pop %v1957
        %v1959 = vmul.f32 %v1704, 1.442695
        %v1960 = vpow.pop %v1959
        %v1961 = vadd.f32 %v1706, %v1708
        %1962 = vadd.xlane.f32.xlu0 %v1961
        %v1963 = vpop.xlane.xlu0 %1962
        %v1964 = vadd.f32 %v1710, %v1712
        %1965 = vadd.xlane.f32.xlu0 %v1964
        %v1966 = vpop.xlane.xlu0 %1965
        %v1967 = vadd.f32 %v1714, %v1716
        %1968 = vadd.xlane.f32.xlu0 %v1967
        %v1969 = vpop.xlane.xlu0 %1968
        %v1970 = vadd.f32 %v1718, %v1720
        %1971 = vadd.xlane.f32.xlu0 %v1970
        %v1972 = vpop.xlane.xlu0 %1971
        %v1973 = vadd.f32 %v1722, %v1724
        %1974 = vadd.xlane.f32.xlu0 %v1973
        %v1975 = vpop.xlane.xlu0 %1974
        %v1976 = vadd.f32 %v1726, %v1728
        %1977 = vadd.xlane.f32.xlu0 %v1976
        %v1978 = vpop.xlane.xlu0 %1977
        %v1979 = vadd.f32 %v1730, %v1732
        %1980 = vadd.xlane.f32.xlu0 %v1979
        %v1981 = vpop.xlane.xlu0 %1980
        %v1982 = vadd.f32 %v1734, %v1736
        %1983 = vadd.xlane.f32.xlu0 %v1982
        %v1984 = vpop.xlane.xlu0 %1983
        %v1985 = vadd.f32 %v1738, %v1740
        %1986 = vadd.xlane.f32.xlu0 %v1985
        %v1987 = vpop.xlane.xlu0 %1986
        %v1988 = vadd.f32 %v1742, %v1744
        %1989 = vadd.xlane.f32.xlu0 %v1988
        %v1990 = vpop.xlane.xlu0 %1989
        %v1991 = vadd.f32 %v1746, %v1748
        %1992 = vadd.xlane.f32.xlu0 %v1991
        %v1993 = vpop.xlane.xlu0 %1992
        %v1994 = vadd.f32 %v1750, %v1752
        %1995 = vadd.xlane.f32.xlu0 %v1994
        %v1996 = vpop.xlane.xlu0 %1995
        %v1997 = vadd.f32 %v1754, %v1756
        %1998 = vadd.xlane.f32.xlu0 %v1997
        %v1999 = vpop.xlane.xlu0 %1998
        %v2000 = vadd.f32 %v1758, %v1760
        %2001 = vadd.xlane.f32.xlu0 %v2000
        %v2002 = vpop.xlane.xlu0 %2001
        %v2003 = vadd.f32 %v1762, %v1764
        %2004 = vadd.xlane.f32.xlu0 %v2003
        %v2005 = vpop.xlane.xlu0 %2004
        %v2006 = vadd.f32 %v1766, %v1768
        %2007 = vadd.xlane.f32.xlu0 %v2006
        %v2008 = vpop.xlane.xlu0 %2007
        %v2009 = vadd.f32 %v1770, %v1772
        %2010 = vadd.xlane.f32.xlu0 %v2009
        %v2011 = vpop.xlane.xlu0 %2010
        %v2012 = vadd.f32 %v1774, %v1776
        %2013 = vadd.xlane.f32.xlu0 %v2012
        %v2014 = vpop.xlane.xlu0 %2013
        %v2015 = vadd.f32 %v1778, %v1780
        %2016 = vadd.xlane.f32.xlu0 %v2015
        %v2017 = vpop.xlane.xlu0 %2016
        %v2018 = vadd.f32 %v1782, %v1784
        %2019 = vadd.xlane.f32.xlu0 %v2018
        %v2020 = vpop.xlane.xlu0 %2019
        %v2021 = vadd.f32 %v1786, %v1788
        %2022 = vadd.xlane.f32.xlu0 %v2021
        %v2023 = vpop.xlane.xlu0 %2022
        %v2024 = vadd.f32 %v1790, %v1792
        %2025 = vadd.xlane.f32.xlu0 %v2024
        %v2026 = vpop.xlane.xlu0 %2025
        %v2027 = vadd.f32 %v1794, %v1796
        %2028 = vadd.xlane.f32.xlu0 %v2027
        %v2029 = vpop.xlane.xlu0 %2028
        %v2030 = vadd.f32 %v1798, %v1800
        %2031 = vadd.xlane.f32.xlu0 %v2030
        %v2032 = vpop.xlane.xlu0 %2031
        %v2033 = vadd.f32 %v1802, %v1804
        %2034 = vadd.xlane.f32.xlu0 %v2033
        %v2035 = vpop.xlane.xlu0 %2034
        %v2036 = vadd.f32 %v1806, %v1808
        %2037 = vadd.xlane.f32.xlu0 %v2036
        %v2038 = vpop.xlane.xlu0 %2037
        %v2039 = vadd.f32 %v1810, %v1812
        %2040 = vadd.xlane.f32.xlu0 %v2039
        %v2041 = vpop.xlane.xlu0 %2040
        %v2042 = vadd.f32 %v1814, %v1816
        %2043 = vadd.xlane.f32.xlu0 %v2042
        %v2044 = vpop.xlane.xlu0 %2043
        %v2045 = vadd.f32 %v1818, %v1820
        %2046 = vadd.xlane.f32.xlu0 %v2045
        %v2047 = vpop.xlane.xlu0 %2046
        %v2048 = vadd.f32 %v1822, %v1824
        %2049 = vadd.xlane.f32.xlu0 %v2048
        %v2050 = vpop.xlane.xlu0 %2049
        %v2051 = vadd.f32 %v1826, %v1828
        %2052 = vadd.xlane.f32.xlu0 %v2051
        %v2053 = vpop.xlane.xlu0 %2052
        %v2054 = vadd.f32 %v1830, %v1832
        %2055 = vadd.xlane.f32.xlu0 %v2054
        %v2056 = vpop.xlane.xlu0 %2055
        %v2057 = vadd.f32 %v1834, %v1836
        %2058 = vadd.xlane.f32.xlu0 %v2057
        %v2059 = vpop.xlane.xlu0 %2058
        %v2060 = vadd.f32 %v1838, %v1840
        %2061 = vadd.xlane.f32.xlu0 %v2060
        %v2062 = vpop.xlane.xlu0 %2061
        %v2063 = vadd.f32 %v1842, %v1844
        %2064 = vadd.xlane.f32.xlu0 %v2063
        %v2065 = vpop.xlane.xlu0 %2064
        %v2066 = vadd.f32 %v1846, %v1848
        %2067 = vadd.xlane.f32.xlu0 %v2066
        %v2068 = vpop.xlane.xlu0 %2067
        %v2069 = vadd.f32 %v1850, %v1852
        %2070 = vadd.xlane.f32.xlu0 %v2069
        %v2071 = vpop.xlane.xlu0 %2070
        %v2072 = vadd.f32 %v1854, %v1856
        %2073 = vadd.xlane.f32.xlu0 %v2072
        %v2074 = vpop.xlane.xlu0 %2073
        %v2075 = vadd.f32 %v1858, %v1860
        %2076 = vadd.xlane.f32.xlu0 %v2075
        %v2077 = vpop.xlane.xlu0 %2076
        %v2078 = vadd.f32 %v1862, %v1864
        %2079 = vadd.xlane.f32.xlu0 %v2078
        %v2080 = vpop.xlane.xlu0 %2079
        %v2081 = vadd.f32 %v1866, %v1868
        %2082 = vadd.xlane.f32.xlu0 %v2081
        %v2083 = vpop.xlane.xlu0 %2082
        %v2084 = vadd.f32 %v1870, %v1872
        %2085 = vadd.xlane.f32.xlu0 %v2084
        %v2086 = vpop.xlane.xlu0 %2085
        %v2087 = vadd.f32 %v1874, %v1876
        %2088 = vadd.xlane.f32.xlu0 %v2087
        %v2089 = vpop.xlane.xlu0 %2088
        %v2090 = vadd.f32 %v1878, %v1880
        %2091 = vadd.xlane.f32.xlu0 %v2090
        %v2092 = vpop.xlane.xlu0 %2091
        %v2093 = vadd.f32 %v1882, %v1884
        %2094 = vadd.xlane.f32.xlu0 %v2093
        %v2095 = vpop.xlane.xlu0 %2094
        %v2096 = vadd.f32 %v1886, %v1888
        %2097 = vadd.xlane.f32.xlu0 %v2096
        %v2098 = vpop.xlane.xlu0 %2097
        %v2099 = vadd.f32 %v1890, %v1892
        %2100 = vadd.xlane.f32.xlu0 %v2099
        %v2101 = vpop.xlane.xlu0 %2100
        %v2102 = vadd.f32 %v1894, %v1896
        %2103 = vadd.xlane.f32.xlu0 %v2102
        %v2104 = vpop.xlane.xlu0 %2103
        %v2105 = vadd.f32 %v1898, %v1900
        %2106 = vadd.xlane.f32.xlu0 %v2105
        %v2107 = vpop.xlane.xlu0 %2106
        %v2108 = vadd.f32 %v1902, %v1904
        %2109 = vadd.xlane.f32.xlu0 %v2108
        %v2110 = vpop.xlane.xlu0 %2109
        %v2111 = vadd.f32 %v1906, %v1908
        %2112 = vadd.xlane.f32.xlu0 %v2111
        %v2113 = vpop.xlane.xlu0 %2112
        %v2114 = vadd.f32 %v1910, %v1912
        %2115 = vadd.xlane.f32.xlu0 %v2114
        %v2116 = vpop.xlane.xlu0 %2115
        %v2117 = vadd.f32 %v1914, %v1916
        %2118 = vadd.xlane.f32.xlu0 %v2117
        %v2119 = vpop.xlane.xlu0 %2118
        %v2120 = vadd.f32 %v1918, %v1920
        %2121 = vadd.xlane.f32.xlu0 %v2120
        %v2122 = vpop.xlane.xlu0 %2121
        %v2123 = vadd.f32 %v1922, %v1924
        %2124 = vadd.xlane.f32.xlu0 %v2123
        %v2125 = vpop.xlane.xlu0 %2124
        %v2126 = vadd.f32 %v1926, %v1928
        %2127 = vadd.xlane.f32.xlu0 %v2126
        %v2128 = vpop.xlane.xlu0 %2127
        %v2129 = vadd.f32 %v1930, %v1932
        %2130 = vadd.xlane.f32.xlu0 %v2129
        %v2131 = vpop.xlane.xlu0 %2130
        %v2132 = vadd.f32 %v1934, %v1936
        %2133 = vadd.xlane.f32.xlu0 %v2132
        %v2134 = vpop.xlane.xlu0 %2133
        %v2135 = vadd.f32 %v1938, %v1940
        %2136 = vadd.xlane.f32.xlu0 %v2135
        %v2137 = vpop.xlane.xlu0 %2136
        %v2138 = vadd.f32 %v1942, %v1944
        %2139 = vadd.xlane.f32.xlu0 %v2138
        %v2140 = vpop.xlane.xlu0 %2139
        %v2141 = vadd.f32 %v1946, %v1948
        %2142 = vadd.xlane.f32.xlu0 %v2141
        %v2143 = vpop.xlane.xlu0 %2142
        %v2144 = vadd.f32 %v1950, %v1952
        %2145 = vadd.xlane.f32.xlu0 %v2144
        %v2146 = vpop.xlane.xlu0 %2145
        %v2147 = vadd.f32 %v1954, %v1956
        %2148 = vadd.xlane.f32.xlu0 %v2147
        %v2149 = vpop.xlane.xlu0 %2148
        %v2150 = vadd.f32 %v1958, %v1960
        %2151 = vadd.xlane.f32.xlu0 %v2150
        %v2152 = vpop.xlane.xlu0 %2151
        %v2153 = vld [vmem:[%s290] sm:$0xff]
        %v2154 = vld [vmem:[%s290 + $0x8] sm:$0xff]
        %v2155 = vld [vmem:[%s290 + $0x10] sm:$0xff]
        %v2156 = vld [vmem:[%s290 + $0x18] sm:$0xff]
        %v2157 = vld [vmem:[%s290 + $0x20] sm:$0xff]
        %v2158 = vld [vmem:[%s290 + $0x28] sm:$0xff]
        %v2159 = vld [vmem:[%s290 + $0x30] sm:$0xff]
        %v2160 = vld [vmem:[%s290 + $0x38] sm:$0xff]
        %v2161 = vld [vmem:[%s290 + $0x40] sm:$0xff]
        %v2162 = vld [vmem:[%s290 + $0x48] sm:$0xff]
        %v2163 = vld [vmem:[%s290 + $0x50] sm:$0xff]
        %v2164 = vld [vmem:[%s290 + $0x58] sm:$0xff]
        %v2165 = vld [vmem:[%s290 + $0x60] sm:$0xff]
        %v2166 = vld [vmem:[%s290 + $0x68] sm:$0xff]
        %v2167 = vld [vmem:[%s290 + $0x70] sm:$0xff]
        %v2168 = vld [vmem:[%s290 + $0x78] sm:$0xff]
        %v2169 = vld [vmem:[%s290 + $0x80] sm:$0xff]
        %v2170 = vld [vmem:[%s290 + $0x88] sm:$0xff]
        %v2171 = vld [vmem:[%s290 + $0x90] sm:$0xff]
        %v2172 = vld [vmem:[%s290 + $0x98] sm:$0xff]
        %v2173 = vld [vmem:[%s290 + $0xa0] sm:$0xff]
        %v2174 = vld [vmem:[%s290 + $0xa8] sm:$0xff]
        %v2175 = vld [vmem:[%s290 + $0xb0] sm:$0xff]
        %v2176 = vld [vmem:[%s290 + $0xb8] sm:$0xff]
        %v2177 = vld [vmem:[%s290 + $0xc0] sm:$0xff]
        %v2178 = vld [vmem:[%s290 + $0xc8] sm:$0xff]
        %v2179 = vld [vmem:[%s290 + $0xd0] sm:$0xff]
        %v2180 = vld [vmem:[%s290 + $0xd8] sm:$0xff]
        %v2181 = vld [vmem:[%s290 + $0xe0] sm:$0xff]
        %v2182 = vld [vmem:[%s290 + $0xe8] sm:$0xff]
        %v2183 = vld [vmem:[%s290 + $0xf0] sm:$0xff]
        %v2184 = vld [vmem:[%s290 + $0xf8] sm:$0xff]
        %v2185 = vld [vmem:[%s290 + $0x100] sm:$0xff]
        %v2186 = vld [vmem:[%s290 + $0x108] sm:$0xff]
        %v2187 = vld [vmem:[%s290 + $0x110] sm:$0xff]
        %v2188 = vld [vmem:[%s290 + $0x118] sm:$0xff]
        %v2189 = vld [vmem:[%s290 + $0x120] sm:$0xff]
        %v2190 = vld [vmem:[%s290 + $0x128] sm:$0xff]
        %v2191 = vld [vmem:[%s290 + $0x130] sm:$0xff]
        %v2192 = vld [vmem:[%s290 + $0x138] sm:$0xff]
        %v2193 = vld [vmem:[%s290 + $0x140] sm:$0xff]
        %v2194 = vld [vmem:[%s290 + $0x148] sm:$0xff]
        %v2195 = vld [vmem:[%s290 + $0x150] sm:$0xff]
        %v2196 = vld [vmem:[%s290 + $0x158] sm:$0xff]
        %v2197 = vld [vmem:[%s290 + $0x160] sm:$0xff]
        %v2198 = vld [vmem:[%s290 + $0x168] sm:$0xff]
        %v2199 = vld [vmem:[%s290 + $0x170] sm:$0xff]
        %v2200 = vld [vmem:[%s290 + $0x178] sm:$0xff]
        %v2201 = vld [vmem:[%s290 + $0x180] sm:$0xff]
        %v2202 = vld [vmem:[%s290 + $0x188] sm:$0xff]
        %v2203 = vld [vmem:[%s290 + $0x190] sm:$0xff]
        %v2204 = vld [vmem:[%s290 + $0x198] sm:$0xff]
        %v2205 = vld [vmem:[%s290 + $0x1a0] sm:$0xff]
        %v2206 = vld [vmem:[%s290 + $0x1a8] sm:$0xff]
        %v2207 = vld [vmem:[%s290 + $0x1b0] sm:$0xff]
        %v2208 = vld [vmem:[%s290 + $0x1b8] sm:$0xff]
        %v2209 = vld [vmem:[%s290 + $0x1c0] sm:$0xff]
        %v2210 = vld [vmem:[%s290 + $0x1c8] sm:$0xff]
        %v2211 = vld [vmem:[%s290 + $0x1d0] sm:$0xff]
        %v2212 = vld [vmem:[%s290 + $0x1d8] sm:$0xff]
        %v2213 = vld [vmem:[%s290 + $0x1e0] sm:$0xff]
        %v2214 = vld [vmem:[%s290 + $0x1e8] sm:$0xff]
        %v2215 = vld [vmem:[%s290 + $0x1f0] sm:$0xff]
        %v2216 = vld [vmem:[%s290 + $0x1f8] sm:$0xff]
        %2217 = vmatprep.subr.mxu0 0.0
        %2218 = vmatpush1.msra.mxu0 %v2153
        %2219 = vmatprep.subr.mxu0 0.0
        %2220 = vmatpush1.msra.mxu0 %v2154
        %2221 = vmatprep.subr.mxu0 0.0
        %2222 = vmatpush1.msra.mxu0 %v2155
        %2223 = vmatprep.subr.mxu0 0.0
        %2224 = vmatpush1.msra.mxu0 %v2156
        %2225 = vmatprep.subr.mxu0 0.0
        %2226 = vmatpush1.msra.mxu0 %v2157
        %2227 = vmatprep.subr.mxu0 0.0
        %2228 = vmatpush1.msra.mxu0 %v2158
        %2229 = vmatprep.subr.mxu0 0.0
        %2230 = vmatpush1.msra.mxu0 %v2159
        %2231 = vmatprep.subr.mxu0 0.0
        %2232 = vmatpush1.msra.mxu0 %v2160
        %2233 = vmatprep.subr.mxu0 0.0
        %2234 = vmatpush1.msra.mxu0 %v2161
        %2235 = vmatprep.subr.mxu0 0.0
        %2236 = vmatpush1.msra.mxu0 %v2162
        %2237 = vmatprep.subr.mxu0 0.0
        %2238 = vmatpush1.msra.mxu0 %v2163
        %2239 = vmatprep.subr.mxu0 0.0
        %2240 = vmatpush1.msra.mxu0 %v2164
        %2241 = vmatprep.subr.mxu0 0.0
        %2242 = vmatpush1.msra.mxu0 %v2165
        %2243 = vmatprep.subr.mxu0 0.0
        %2244 = vmatpush1.msra.mxu0 %v2166
        %2245 = vmatprep.subr.mxu0 0.0
        %2246 = vmatpush1.msra.mxu0 %v2167
        %2247 = vmatprep.subr.mxu0 0.0
        %2248 = vmatpush1.msra.mxu0 %v2168
        %2249 = vmatprep.subr.mxu0 0.0
        %2250 = vmatpush1.msra.mxu0 %v2169
        %2251 = vmatprep.subr.mxu0 0.0
        %2252 = vmatpush1.msra.mxu0 %v2170
        %2253 = vmatprep.subr.mxu0 0.0
        %2254 = vmatpush1.msra.mxu0 %v2171
        %2255 = vmatprep.subr.mxu0 0.0
        %2256 = vmatpush1.msra.mxu0 %v2172
        %2257 = vmatprep.subr.mxu0 0.0
        %2258 = vmatpush1.msra.mxu0 %v2173
        %2259 = vmatprep.subr.mxu0 0.0
        %2260 = vmatpush1.msra.mxu0 %v2174
        %2261 = vmatprep.subr.mxu0 0.0
        %2262 = vmatpush1.msra.mxu0 %v2175
        %2263 = vmatprep.subr.mxu0 0.0
        %2264 = vmatpush1.msra.mxu0 %v2176
        %2265 = vmatprep.subr.mxu0 0.0
        %2266 = vmatpush1.msra.mxu0 %v2177
        %2267 = vmatprep.subr.mxu0 0.0
        %2268 = vmatpush1.msra.mxu0 %v2178
        %2269 = vmatprep.subr.mxu0 0.0
        %2270 = vmatpush1.msra.mxu0 %v2179
        %2271 = vmatprep.subr.mxu0 0.0
        %2272 = vmatpush1.msra.mxu0 %v2180
        %2273 = vmatprep.subr.mxu0 0.0
        %2274 = vmatpush1.msra.mxu0 %v2181
        %2275 = vmatprep.subr.mxu0 0.0
        %2276 = vmatpush1.msra.mxu0 %v2182
        %2277 = vmatprep.subr.mxu0 0.0
        %2278 = vmatpush1.msra.mxu0 %v2183
        %2279 = vmatprep.subr.mxu0 0.0
        %2280 = vmatpush1.msra.mxu0 %v2184
        %2281 = vmatprep.mubr.f32.mxu0 %v1708
        %2282 = vmatmul.mubr.f32.gmra.mrb[0].mxu0 %v1706
        %v2283 = vpop.f32.mrb[0].mxu0
        %v2284 = vadd.f32 0.0, %v2283
        %v2285 = vpop.f32.mrb[0].mxu0
        %2286 = vmatprep.mubr.f32.mxu0 %v1712
        %2287 = vmatmul.mubr.f32.gmra.mrb[0].mxu0 %v1710
        %v2288 = vpop.f32.mrb[0].mxu0
        %v2289 = vadd.f32 0.0, %v2288
        %v2290 = vpop.f32.mrb[0].mxu0
        %2291 = vmatprep.mubr.f32.mxu0 %v1716
        %2292 = vmatmul.mubr.f32.gmra.mrb[0].mxu0 %v1714
        %v2293 = vpop.f32.mrb[0].mxu0
        %v2294 = vadd.f32 0.0, %v2293
        %v2295 = vpop.f32.mrb[0].mxu0
        %2296 = vmatprep.mubr.f32.mxu0 %v1720
        %2297 = vmatmul.mubr.f32.gmra.mrb[0].mxu0 %v1718
        %v2298 = vpop.f32.mrb[0].mxu0
        %v2299 = vadd.f32 0.0, %v2298
        %v2300 = vpop.f32.mrb[0].mxu0
        %2301 = vmatprep.mubr.f32.mxu0 %v1724
        %2302 = vmatmul.mubr.f32.gmra.mrb[0].mxu0 %v1722
        %v2303 = vpop.f32.mrb[0].mxu0
        %v2304 = vadd.f32 0.0, %v2303
        %v2305 = vpop.f32.mrb[0].mxu0
        %2306 = vmatprep.mubr.f32.mxu0 %v1728
        %2307 = vmatmul.mubr.f32.gmra.mrb[0].mxu0 %v1726
        %v2308 = vpop.f32.mrb[0].mxu0
        %v2309 = vadd.f32 0.0, %v2308
        %v2310 = vpop.f32.mrb[0].mxu0
        %2311 = vmatprep.mubr.f32.mxu0 %v1732
        %2312 = vmatmul.mubr.f32.gmra.mrb[0].mxu0 %v1730
        %v2313 = vpop.f32.mrb[0].mxu0
        %v2314 = vadd.f32 0.0, %v2313
        %v2315 = vpop.f32.mrb[0].mxu0
        %2316 = vmatprep.mubr.f32.mxu0 %v1736
        %2317 = vmatmul.mubr.f32.gmra.mrb[0].mxu0 %v1734
        %v2318 = vpop.f32.mrb[0].mxu0
        %v2319 = vadd.f32 0.0, %v2318
        %v2320 = vpop.f32.mrb[0].mxu0
        %2321 = vmatprep.mubr.f32.mxu0 %v1740
        %2322 = vmatmul.mubr.f32.gmra.mrb[0].mxu0 %v1738
        %v2323 = vpop.f32.mrb[0].mxu0
        %v2324 = vadd.f32 0.0, %v2323
        %v2325 = vpop.f32.mrb[0].mxu0
        %2326 = vmatprep.mubr.f32.mxu0 %v1744
        %2327 = vmatmul.mubr.f32.gmra.mrb[0].mxu0 %v1742
        %v2328 = vpop.f32.mrb[0].mxu0
        %v2329 = vadd.f32 0.0, %v2328
        %v2330 = vpop.f32.mrb[0].mxu0
        %2331 = vmatprep.mubr.f32.mxu0 %v1748
        %2332 = vmatmul.mubr.f32.gmra.mrb[0].mxu0 %v1746
        %v2333 = vpop.f32.mrb[0].mxu0
        %v2334 = vadd.f32 0.0, %v2333
        %v2335 = vpop.f32.mrb[0].mxu0
        %2336 = vmatprep.mubr.f32.mxu0 %v1752
        %2337 = vmatmul.mubr.f32.gmra.mrb[0].mxu0 %v1750
        %v2338 = vpop.f32.mrb[0].mxu0
        %v2339 = vadd.f32 0.0, %v2338
        %v2340 = vpop.f32.mrb[0].mxu0
        %2341 = vmatprep.mubr.f32.mxu0 %v1756
        %2342 = vmatmul.mubr.f32.gmra.mrb[0].mxu0 %v1754
        %v2343 = vpop.f32.mrb[0].mxu0
        %v2344 = vadd.f32 0.0, %v2343
        %v2345 = vpop.f32.mrb[0].mxu0
        %2346 = vmatprep.mubr.f32.mxu0 %v1760
        %2347 = vmatmul.mubr.f32.gmra.mrb[0].mxu0 %v1758
        %v2348 = vpop.f32.mrb[0].mxu0
        %v2349 = vadd.f32 0.0, %v2348
        %v2350 = vpop.f32.mrb[0].mxu0
        %2351 = vmatprep.mubr.f32.mxu0 %v1764
        %2352 = vmatmul.mubr.f32.gmra.mrb[0].mxu0 %v1762
        %v2353 = vpop.f32.mrb[0].mxu0
        %v2354 = vadd.f32 0.0, %v2353
        %v2355 = vpop.f32.mrb[0].mxu0
        %2356 = vmatprep.mubr.f32.mxu0 %v1768
        %2357 = vmatmul.mubr.f32.gmra.mrb[0].mxu0 %v1766
        %v2358 = vpop.f32.mrb[0].mxu0
        %v2359 = vadd.f32 0.0, %v2358
        %v2360 = vpop.f32.mrb[0].mxu0
        %2361 = vmatprep.mubr.f32.mxu0 %v1772
        %2362 = vmatmul.mubr.f32.gmra.mrb[0].mxu0 %v1770
        %v2363 = vpop.f32.mrb[0].mxu0
        %v2364 = vadd.f32 0.0, %v2363
        %v2365 = vpop.f32.mrb[0].mxu0
        %2366 = vmatprep.mubr.f32.mxu0 %v1776
        %2367 = vmatmul.mubr.f32.gmra.mrb[0].mxu0 %v1774
        %v2368 = vpop.f32.mrb[0].mxu0
        %v2369 = vadd.f32 0.0, %v2368
        %v2370 = vpop.f32.mrb[0].mxu0
        %2371 = vmatprep.mubr.f32.mxu0 %v1780
        %2372 = vmatmul.mubr.f32.gmra.mrb[0].mxu0 %v1778
        %v2373 = vpop.f32.mrb[0].mxu0
        %v2374 = vadd.f32 0.0, %v2373
        %v2375 = vpop.f32.mrb[0].mxu0
        %2376 = vmatprep.mubr.f32.mxu0 %v1784
        %2377 = vmatmul.mubr.f32.gmra.mrb[0].mxu0 %v1782
        %v2378 = vpop.f32.mrb[0].mxu0
        %v2379 = vadd.f32 0.0, %v2378
        %v2380 = vpop.f32.mrb[0].mxu0
        %2381 = vmatprep.mubr.f32.mxu0 %v1788
        %2382 = vmatmul.mubr.f32.gmra.mrb[0].mxu0 %v1786
        %v2383 = vpop.f32.mrb[0].mxu0
        %v2384 = vadd.f32 0.0, %v2383
        %v2385 = vpop.f32.mrb[0].mxu0
        %2386 = vmatprep.mubr.f32.mxu0 %v1792
        %2387 = vmatmul.mubr.f32.gmra.mrb[0].mxu0 %v1790
        %v2388 = vpop.f32.mrb[0].mxu0
        %v2389 = vadd.f32 0.0, %v2388
        %v2390 = vpop.f32.mrb[0].mxu0
        %2391 = vmatprep.mubr.f32.mxu0 %v1796
        %2392 = vmatmul.mubr.f32.gmra.mrb[0].mxu0 %v1794
        %v2393 = vpop.f32.mrb[0].mxu0
        %v2394 = vadd.f32 0.0, %v2393
        %v2395 = vpop.f32.mrb[0].mxu0
        %2396 = vmatprep.mubr.f32.mxu0 %v1800
        %2397 = vmatmul.mubr.f32.gmra.mrb[0].mxu0 %v1798
        %v2398 = vpop.f32.mrb[0].mxu0
        %v2399 = vadd.f32 0.0, %v2398
        %v2400 = vpop.f32.mrb[0].mxu0
        %2401 = vmatprep.mubr.f32.mxu0 %v1804
        %2402 = vmatmul.mubr.f32.gmra.mrb[0].mxu0 %v1802
        %v2403 = vpop.f32.mrb[0].mxu0
        %v2404 = vadd.f32 0.0, %v2403
        %v2405 = vpop.f32.mrb[0].mxu0
        %2406 = vmatprep.mubr.f32.mxu0 %v1808
        %2407 = vmatmul.mubr.f32.gmra.mrb[0].mxu0 %v1806
        %v2408 = vpop.f32.mrb[0].mxu0
        %v2409 = vadd.f32 0.0, %v2408
        %v2410 = vpop.f32.mrb[0].mxu0
        %2411 = vmatprep.mubr.f32.mxu0 %v1812
        %2412 = vmatmul.mubr.f32.gmra.mrb[0].mxu0 %v1810
        %v2413 = vpop.f32.mrb[0].mxu0
        %v2414 = vadd.f32 0.0, %v2413
        %v2415 = vpop.f32.mrb[0].mxu0
        %2416 = vmatprep.mubr.f32.mxu0 %v1816
        %2417 = vmatmul.mubr.f32.gmra.mrb[0].mxu0 %v1814
        %v2418 = vpop.f32.mrb[0].mxu0
        %v2419 = vadd.f32 0.0, %v2418
        %v2420 = vpop.f32.mrb[0].mxu0
        %2421 = vmatprep.mubr.f32.mxu0 %v1820
        %2422 = vmatmul.mubr.f32.gmra.mrb[0].mxu0 %v1818
        %v2423 = vpop.f32.mrb[0].mxu0
        %v2424 = vadd.f32 0.0, %v2423
        %v2425 = vpop.f32.mrb[0].mxu0
        %2426 = vmatprep.mubr.f32.mxu0 %v1824
        %2427 = vmatmul.mubr.f32.gmra.mrb[0].mxu0 %v1822
        %v2428 = vpop.f32.mrb[0].mxu0
        %v2429 = vadd.f32 0.0, %v2428
        %v2430 = vpop.f32.mrb[0].mxu0
        %2431 = vmatprep.mubr.f32.mxu0 %v1828
        %2432 = vmatmul.mubr.f32.gmra.mrb[0].mxu0 %v1826
        %v2433 = vpop.f32.mrb[0].mxu0
        %v2434 = vadd.f32 0.0, %v2433
        %v2435 = vpop.f32.mrb[0].mxu0
        %2436 = vmatprep.mubr.f32.mxu0 %v1832
        %2437 = vmatmul.mubr.f32.gmra.mrb[0].mxu0 %v1830
        %v2438 = vpop.f32.mrb[0].mxu0
        %v2439 = vadd.f32 0.0, %v2438
        %v2440 = vpop.f32.mrb[0].mxu0
        %2441 = vdwg.mxu0
        %2442 = vmatprep.subr.mxu0 0.0
        %2443 = vmatpush1.msra.mxu0 %v2185
        %2444 = vmatprep.subr.mxu0 0.0
        %2445 = vmatpush1.msra.mxu0 %v2186
        %2446 = vmatprep.subr.mxu0 0.0
        %2447 = vmatpush1.msra.mxu0 %v2187
        %2448 = vmatprep.subr.mxu0 0.0
        %2449 = vmatpush1.msra.mxu0 %v2188
        %2450 = vmatprep.subr.mxu0 0.0
        %2451 = vmatpush1.msra.mxu0 %v2189
        %2452 = vmatprep.subr.mxu0 0.0
        %2453 = vmatpush1.msra.mxu0 %v2190
        %2454 = vmatprep.subr.mxu0 0.0
        %2455 = vmatpush1.msra.mxu0 %v2191
        %2456 = vmatprep.subr.mxu0 0.0
        %2457 = vmatpush1.msra.mxu0 %v2192
        %2458 = vmatprep.subr.mxu0 0.0
        %2459 = vmatpush1.msra.mxu0 %v2193
        %2460 = vmatprep.subr.mxu0 0.0
        %2461 = vmatpush1.msra.mxu0 %v2194
        %2462 = vmatprep.subr.mxu0 0.0
        %2463 = vmatpush1.msra.mxu0 %v2195
        %2464 = vmatprep.subr.mxu0 0.0
        %2465 = vmatpush1.msra.mxu0 %v2196
        %2466 = vmatprep.subr.mxu0 0.0
        %2467 = vmatpush1.msra.mxu0 %v2197
        %2468 = vmatprep.subr.mxu0 0.0
        %2469 = vmatpush1.msra.mxu0 %v2198
        %2470 = vmatprep.subr.mxu0 0.0
        %2471 = vmatpush1.msra.mxu0 %v2199
        %2472 = vmatprep.subr.mxu0 0.0
        %2473 = vmatpush1.msra.mxu0 %v2200
        %2474 = vmatprep.subr.mxu0 0.0
        %2475 = vmatpush1.msra.mxu0 %v2201
        %2476 = vmatprep.subr.mxu0 0.0
        %2477 = vmatpush1.msra.mxu0 %v2202
        %2478 = vmatprep.subr.mxu0 0.0
        %2479 = vmatpush1.msra.mxu0 %v2203
        %2480 = vmatprep.subr.mxu0 0.0
        %2481 = vmatpush1.msra.mxu0 %v2204
        %2482 = vmatprep.subr.mxu0 0.0
        %2483 = vmatpush1.msra.mxu0 %v2205
        %2484 = vmatprep.subr.mxu0 0.0
        %2485 = vmatpush1.msra.mxu0 %v2206
        %2486 = vmatprep.subr.mxu0 0.0
        %2487 = vmatpush1.msra.mxu0 %v2207
        %2488 = vmatprep.subr.mxu0 0.0
        %2489 = vmatpush1.msra.mxu0 %v2208
        %2490 = vmatprep.subr.mxu0 0.0
        %2491 = vmatpush1.msra.mxu0 %v2209
        %2492 = vmatprep.subr.mxu0 0.0
        %2493 = vmatpush1.msra.mxu0 %v2210
        %2494 = vmatprep.subr.mxu0 0.0
        %2495 = vmatpush1.msra.mxu0 %v2211
        %2496 = vmatprep.subr.mxu0 0.0
        %2497 = vmatpush1.msra.mxu0 %v2212
        %2498 = vmatprep.subr.mxu0 0.0
        %2499 = vmatpush1.msra.mxu0 %v2213
        %2500 = vmatprep.subr.mxu0 0.0
        %2501 = vmatpush1.msra.mxu0 %v2214
        %2502 = vmatprep.subr.mxu0 0.0
        %2503 = vmatpush1.msra.mxu0 %v2215
        %2504 = vmatprep.subr.mxu0 0.0
        %2505 = vmatpush1.msra.mxu0 %v2216
        %2506 = vmatprep.mubr.f32.mxu0 %v1836
        %2507 = vmatmul.mubr.f32.gmra.mrb[0].mxu0 %v1834
        %v2508 = vpop.f32.mrb[0].mxu0
        %v2509 = vadd.f32 0.0, %v2508
        %v2510 = vpop.f32.mrb[0].mxu0
        %2511 = vmatprep.mubr.f32.mxu0 %v1840
        %2512 = vmatmul.mubr.f32.gmra.mrb[0].mxu0 %v1838
        %v2513 = vpop.f32.mrb[0].mxu0
        %v2514 = vadd.f32 0.0, %v2513
        %v2515 = vpop.f32.mrb[0].mxu0
        %2516 = vmatprep.mubr.f32.mxu0 %v1844
        %2517 = vmatmul.mubr.f32.gmra.mrb[0].mxu0 %v1842
        %v2518 = vpop.f32.mrb[0].mxu0
        %v2519 = vadd.f32 0.0, %v2518
        %v2520 = vpop.f32.mrb[0].mxu0
        %2521 = vmatprep.mubr.f32.mxu0 %v1848
        %2522 = vmatmul.mubr.f32.gmra.mrb[0].mxu0 %v1846
        %v2523 = vpop.f32.mrb[0].mxu0
        %v2524 = vadd.f32 0.0, %v2523
        %v2525 = vpop.f32.mrb[0].mxu0
        %2526 = vmatprep.mubr.f32.mxu0 %v1852
        %2527 = vmatmul.mubr.f32.gmra.mrb[0].mxu0 %v1850
        %v2528 = vpop.f32.mrb[0].mxu0
        %v2529 = vadd.f32 0.0, %v2528
        %v2530 = vpop.f32.mrb[0].mxu0
        %2531 = vmatprep.mubr.f32.mxu0 %v1856
        %2532 = vmatmul.mubr.f32.gmra.mrb[0].mxu0 %v1854
        %v2533 = vpop.f32.mrb[0].mxu0
        %v2534 = vadd.f32 0.0, %v2533
        %v2535 = vpop.f32.mrb[0].mxu0
        %2536 = vmatprep.mubr.f32.mxu0 %v1860
        %2537 = vmatmul.mubr.f32.gmra.mrb[0].mxu0 %v1858
        %v2538 = vpop.f32.mrb[0].mxu0
        %v2539 = vadd.f32 0.0, %v2538
        %v2540 = vpop.f32.mrb[0].mxu0
        %2541 = vmatprep.mubr.f32.mxu0 %v1864
        %2542 = vmatmul.mubr.f32.gmra.mrb[0].mxu0 %v1862
        %v2543 = vpop.f32.mrb[0].mxu0
        %v2544 = vadd.f32 0.0, %v2543
        %v2545 = vpop.f32.mrb[0].mxu0
        %2546 = vmatprep.mubr.f32.mxu0 %v1868
        %2547 = vmatmul.mubr.f32.gmra.mrb[0].mxu0 %v1866
        %v2548 = vpop.f32.mrb[0].mxu0
        %v2549 = vadd.f32 0.0, %v2548
        %v2550 = vpop.f32.mrb[0].mxu0
        %2551 = vmatprep.mubr.f32.mxu0 %v1872
        %2552 = vmatmul.mubr.f32.gmra.mrb[0].mxu0 %v1870
        %v2553 = vpop.f32.mrb[0].mxu0
        %v2554 = vadd.f32 0.0, %v2553
        %v2555 = vpop.f32.mrb[0].mxu0
        %2556 = vmatprep.mubr.f32.mxu0 %v1876
        %2557 = vmatmul.mubr.f32.gmra.mrb[0].mxu0 %v1874
        %v2558 = vpop.f32.mrb[0].mxu0
        %v2559 = vadd.f32 0.0, %v2558
        %v2560 = vpop.f32.mrb[0].mxu0
        %2561 = vmatprep.mubr.f32.mxu0 %v1880
        %2562 = vmatmul.mubr.f32.gmra.mrb[0].mxu0 %v1878
        %v2563 = vpop.f32.mrb[0].mxu0
        %v2564 = vadd.f32 0.0, %v2563
        %v2565 = vpop.f32.mrb[0].mxu0
        %2566 = vmatprep.mubr.f32.mxu0 %v1884
        %2567 = vmatmul.mubr.f32.gmra.mrb[0].mxu0 %v1882
        %v2568 = vpop.f32.mrb[0].mxu0
        %v2569 = vadd.f32 0.0, %v2568
        %v2570 = vpop.f32.mrb[0].mxu0
        %2571 = vmatprep.mubr.f32.mxu0 %v1888
        %2572 = vmatmul.mubr.f32.gmra.mrb[0].mxu0 %v1886
        %v2573 = vpop.f32.mrb[0].mxu0
        %v2574 = vadd.f32 0.0, %v2573
        %v2575 = vpop.f32.mrb[0].mxu0
        %2576 = vmatprep.mubr.f32.mxu0 %v1892
        %2577 = vmatmul.mubr.f32.gmra.mrb[0].mxu0 %v1890
        %v2578 = vpop.f32.mrb[0].mxu0
        %v2579 = vadd.f32 0.0, %v2578
        %v2580 = vpop.f32.mrb[0].mxu0
        %2581 = vmatprep.mubr.f32.mxu0 %v1896
        %2582 = vmatmul.mubr.f32.gmra.mrb[0].mxu0 %v1894
        %v2583 = vpop.f32.mrb[0].mxu0
        %v2584 = vadd.f32 0.0, %v2583
        %v2585 = vpop.f32.mrb[0].mxu0
        %2586 = vmatprep.mubr.f32.mxu0 %v1900
        %2587 = vmatmul.mubr.f32.gmra.mrb[0].mxu0 %v1898
        %v2588 = vpop.f32.mrb[0].mxu0
        %v2589 = vadd.f32 0.0, %v2588
        %v2590 = vpop.f32.mrb[0].mxu0
        %2591 = vmatprep.mubr.f32.mxu0 %v1904
        %2592 = vmatmul.mubr.f32.gmra.mrb[0].mxu0 %v1902
        %v2593 = vpop.f32.mrb[0].mxu0
        %v2594 = vadd.f32 0.0, %v2593
        %v2595 = vpop.f32.mrb[0].mxu0
        %2596 = vmatprep.mubr.f32.mxu0 %v1908
        %2597 = vmatmul.mubr.f32.gmra.mrb[0].mxu0 %v1906
        %v2598 = vpop.f32.mrb[0].mxu0
        %v2599 = vadd.f32 0.0, %v2598
        %v2600 = vpop.f32.mrb[0].mxu0
        %2601 = vmatprep.mubr.f32.mxu0 %v1912
        %2602 = vmatmul.mubr.f32.gmra.mrb[0].mxu0 %v1910
        %v2603 = vpop.f32.mrb[0].mxu0
        %v2604 = vadd.f32 0.0, %v2603
        %v2605 = vpop.f32.mrb[0].mxu0
        %2606 = vmatprep.mubr.f32.mxu0 %v1916
        %2607 = vmatmul.mubr.f32.gmra.mrb[0].mxu0 %v1914
        %v2608 = vpop.f32.mrb[0].mxu0
        %v2609 = vadd.f32 0.0, %v2608
        %v2610 = vpop.f32.mrb[0].mxu0
        %2611 = vmatprep.mubr.f32.mxu0 %v1920
        %2612 = vmatmul.mubr.f32.gmra.mrb[0].mxu0 %v1918
        %v2613 = vpop.f32.mrb[0].mxu0
        %v2614 = vadd.f32 0.0, %v2613
        %v2615 = vpop.f32.mrb[0].mxu0
        %2616 = vmatprep.mubr.f32.mxu0 %v1924
        %2617 = vmatmul.mubr.f32.gmra.mrb[0].mxu0 %v1922
        %v2618 = vpop.f32.mrb[0].mxu0
        %v2619 = vadd.f32 0.0, %v2618
        %v2620 = vpop.f32.mrb[0].mxu0
        %2621 = vmatprep.mubr.f32.mxu0 %v1928
        %2622 = vmatmul.mubr.f32.gmra.mrb[0].mxu0 %v1926
        %v2623 = vpop.f32.mrb[0].mxu0
        %v2624 = vadd.f32 0.0, %v2623
        %v2625 = vpop.f32.mrb[0].mxu0
        %2626 = vmatprep.mubr.f32.mxu0 %v1932
        %2627 = vmatmul.mubr.f32.gmra.mrb[0].mxu0 %v1930
        %v2628 = vpop.f32.mrb[0].mxu0
        %v2629 = vadd.f32 0.0, %v2628
        %v2630 = vpop.f32.mrb[0].mxu0
        %2631 = vmatprep.mubr.f32.mxu0 %v1936
        %2632 = vmatmul.mubr.f32.gmra.mrb[0].mxu0 %v1934
        %v2633 = vpop.f32.mrb[0].mxu0
        %v2634 = vadd.f32 0.0, %v2633
        %v2635 = vpop.f32.mrb[0].mxu0
        %2636 = vmatprep.mubr.f32.mxu0 %v1940
        %2637 = vmatmul.mubr.f32.gmra.mrb[0].mxu0 %v1938
        %v2638 = vpop.f32.mrb[0].mxu0
        %v2639 = vadd.f32 0.0, %v2638
        %v2640 = vpop.f32.mrb[0].mxu0
        %2641 = vmatprep.mubr.f32.mxu0 %v1944
        %2642 = vmatmul.mubr.f32.gmra.mrb[0].mxu0 %v1942
        %v2643 = vpop.f32.mrb[0].mxu0
        %v2644 = vadd.f32 0.0, %v2643
        %v2645 = vpop.f32.mrb[0].mxu0
        %2646 = vmatprep.mubr.f32.mxu0 %v1948
        %2647 = vmatmul.mubr.f32.gmra.mrb[0].mxu0 %v1946
        %v2648 = vpop.f32.mrb[0].mxu0
        %v2649 = vadd.f32 0.0, %v2648
        %v2650 = vpop.f32.mrb[0].mxu0
        %2651 = vmatprep.mubr.f32.mxu0 %v1952
        %2652 = vmatmul.mubr.f32.gmra.mrb[0].mxu0 %v1950
        %v2653 = vpop.f32.mrb[0].mxu0
        %v2654 = vadd.f32 0.0, %v2653
        %v2655 = vpop.f32.mrb[0].mxu0
        %2656 = vmatprep.mubr.f32.mxu0 %v1956
        %2657 = vmatmul.mubr.f32.gmra.mrb[0].mxu0 %v1954
        %v2658 = vpop.f32.mrb[0].mxu0
        %v2659 = vadd.f32 0.0, %v2658
        %v2660 = vpop.f32.mrb[0].mxu0
        %2661 = vmatprep.mubr.f32.mxu0 %v1960
        %2662 = vmatmul.mubr.f32.gmra.mrb[0].mxu0 %v1958
        %v2663 = vpop.f32.mrb[0].mxu0
        %v2664 = vadd.f32 0.0, %v2663
        %v2665 = vpop.f32.mrb[0].mxu0
        %2666 = vdwg.mxu0
        %v2667 = vrcp.pop %v1963
        %v2668 = vmul.f32 1.0, %v2667
        %v2669 = vrcp.pop %v1966
        %v2670 = vmul.f32 1.0, %v2669
        %v2671 = vrcp.pop %v1969
        %v2672 = vmul.f32 1.0, %v2671
        %v2673 = vrcp.pop %v1972
        %v2674 = vmul.f32 1.0, %v2673
        %v2675 = vrcp.pop %v1975
        %v2676 = vmul.f32 1.0, %v2675
        %v2677 = vrcp.pop %v1978
        %v2678 = vmul.f32 1.0, %v2677
        %v2679 = vrcp.pop %v1981
        %v2680 = vmul.f32 1.0, %v2679
        %v2681 = vrcp.pop %v1984
        %v2682 = vmul.f32 1.0, %v2681
        %v2683 = vrcp.pop %v1987
        %v2684 = vmul.f32 1.0, %v2683
        %v2685 = vrcp.pop %v1990
        %v2686 = vmul.f32 1.0, %v2685
        %v2687 = vrcp.pop %v1993
        %v2688 = vmul.f32 1.0, %v2687
        %v2689 = vrcp.pop %v1996
        %v2690 = vmul.f32 1.0, %v2689
        %v2691 = vrcp.pop %v1999
        %v2692 = vmul.f32 1.0, %v2691
        %v2693 = vrcp.pop %v2002
        %v2694 = vmul.f32 1.0, %v2693
        %v2695 = vrcp.pop %v2005
        %v2696 = vmul.f32 1.0, %v2695
        %v2697 = vrcp.pop %v2008
        %v2698 = vmul.f32 1.0, %v2697
        %v2699 = vrcp.pop %v2011
        %v2700 = vmul.f32 1.0, %v2699
        %v2701 = vrcp.pop %v2014
        %v2702 = vmul.f32 1.0, %v2701
        %v2703 = vrcp.pop %v2017
        %v2704 = vmul.f32 1.0, %v2703
        %v2705 = vrcp.pop %v2020
        %v2706 = vmul.f32 1.0, %v2705
        %v2707 = vrcp.pop %v2023
        %v2708 = vmul.f32 1.0, %v2707
        %v2709 = vrcp.pop %v2026
        %v2710 = vmul.f32 1.0, %v2709
        %v2711 = vrcp.pop %v2029
        %v2712 = vmul.f32 1.0, %v2711
        %v2713 = vrcp.pop %v2032
        %v2714 = vmul.f32 1.0, %v2713
        %v2715 = vrcp.pop %v2035
        %v2716 = vmul.f32 1.0, %v2715
        %v2717 = vrcp.pop %v2038
        %v2718 = vmul.f32 1.0, %v2717
        %v2719 = vrcp.pop %v2041
        %v2720 = vmul.f32 1.0, %v2719
        %v2721 = vrcp.pop %v2044
        %v2722 = vmul.f32 1.0, %v2721
        %v2723 = vrcp.pop %v2047
        %v2724 = vmul.f32 1.0, %v2723
        %v2725 = vrcp.pop %v2050
        %v2726 = vmul.f32 1.0, %v2725
        %v2727 = vrcp.pop %v2053
        %v2728 = vmul.f32 1.0, %v2727
        %v2729 = vrcp.pop %v2056
        %v2730 = vmul.f32 1.0, %v2729
        %v2731 = vrcp.pop %v2059
        %v2732 = vmul.f32 1.0, %v2731
        %v2733 = vrcp.pop %v2062
        %v2734 = vmul.f32 1.0, %v2733
        %v2735 = vrcp.pop %v2065
        %v2736 = vmul.f32 1.0, %v2735
        %v2737 = vrcp.pop %v2068
        %v2738 = vmul.f32 1.0, %v2737
        %v2739 = vrcp.pop %v2071
        %v2740 = vmul.f32 1.0, %v2739
        %v2741 = vrcp.pop %v2074
        %v2742 = vmul.f32 1.0, %v2741
        %v2743 = vrcp.pop %v2077
        %v2744 = vmul.f32 1.0, %v2743
        %v2745 = vrcp.pop %v2080
        %v2746 = vmul.f32 1.0, %v2745
        %v2747 = vrcp.pop %v2083
        %v2748 = vmul.f32 1.0, %v2747
        %v2749 = vrcp.pop %v2086
        %v2750 = vmul.f32 1.0, %v2749
        %v2751 = vrcp.pop %v2089
        %v2752 = vmul.f32 1.0, %v2751
        %v2753 = vrcp.pop %v2092
        %v2754 = vmul.f32 1.0, %v2753
        %v2755 = vrcp.pop %v2095
        %v2756 = vmul.f32 1.0, %v2755
        %v2757 = vrcp.pop %v2098
        %v2758 = vmul.f32 1.0, %v2757
        %v2759 = vrcp.pop %v2101
        %v2760 = vmul.f32 1.0, %v2759
        %v2761 = vrcp.pop %v2104
        %v2762 = vmul.f32 1.0, %v2761
        %v2763 = vrcp.pop %v2107
        %v2764 = vmul.f32 1.0, %v2763
        %v2765 = vrcp.pop %v2110
        %v2766 = vmul.f32 1.0, %v2765
        %v2767 = vrcp.pop %v2113
        %v2768 = vmul.f32 1.0, %v2767
        %v2769 = vrcp.pop %v2116
        %v2770 = vmul.f32 1.0, %v2769
        %v2771 = vrcp.pop %v2119
        %v2772 = vmul.f32 1.0, %v2771
        %v2773 = vrcp.pop %v2122
        %v2774 = vmul.f32 1.0, %v2773
        %v2775 = vrcp.pop %v2125
        %v2776 = vmul.f32 1.0, %v2775
        %v2777 = vrcp.pop %v2128
        %v2778 = vmul.f32 1.0, %v2777
        %v2779 = vrcp.pop %v2131
        %v2780 = vmul.f32 1.0, %v2779
        %v2781 = vrcp.pop %v2134
        %v2782 = vmul.f32 1.0, %v2781
        %v2783 = vrcp.pop %v2137
        %v2784 = vmul.f32 1.0, %v2783
        %v2785 = vrcp.pop %v2140
        %v2786 = vmul.f32 1.0, %v2785
        %v2787 = vrcp.pop %v2143
        %v2788 = vmul.f32 1.0, %v2787
        %v2789 = vrcp.pop %v2146
        %v2790 = vmul.f32 1.0, %v2789
        %v2791 = vrcp.pop %v2149
        %v2792 = vmul.f32 1.0, %v2791
        %v2793 = vrcp.pop %v2152
        %v2794 = vmul.f32 1.0, %v2793
        %v2795 = vmul.f32 %v2284, %v2668
        %v2796 = vmul.f32 %v2289, %v2670
        %v2797 = vmul.f32 %v2294, %v2672
        %v2798 = vmul.f32 %v2299, %v2674
        %v2799 = vmul.f32 %v2304, %v2676
        %v2800 = vmul.f32 %v2309, %v2678
        %v2801 = vmul.f32 %v2314, %v2680
        %v2802 = vmul.f32 %v2319, %v2682
        %v2803 = vmul.f32 %v2324, %v2684
        %v2804 = vmul.f32 %v2329, %v2686
        %v2805 = vmul.f32 %v2334, %v2688
        %v2806 = vmul.f32 %v2339, %v2690
        %v2807 = vmul.f32 %v2344, %v2692
        %v2808 = vmul.f32 %v2349, %v2694
        %v2809 = vmul.f32 %v2354, %v2696
        %v2810 = vmul.f32 %v2359, %v2698
        %v2811 = vmul.f32 %v2364, %v2700
        %v2812 = vmul.f32 %v2369, %v2702
        %v2813 = vmul.f32 %v2374, %v2704
        %v2814 = vmul.f32 %v2379, %v2706
        %v2815 = vmul.f32 %v2384, %v2708
        %v2816 = vmul.f32 %v2389, %v2710
        %v2817 = vmul.f32 %v2394, %v2712
        %v2818 = vmul.f32 %v2399, %v2714
        %v2819 = vmul.f32 %v2404, %v2716
        %v2820 = vmul.f32 %v2409, %v2718
        %v2821 = vmul.f32 %v2414, %v2720
        %v2822 = vmul.f32 %v2419, %v2722
        %v2823 = vmul.f32 %v2424, %v2724
        %v2824 = vmul.f32 %v2429, %v2726
        %v2825 = vmul.f32 %v2434, %v2728
        %v2826 = vmul.f32 %v2439, %v2730
        %v2827 = vmul.f32 %v2509, %v2732
        %v2828 = vmul.f32 %v2514, %v2734
        %v2829 = vmul.f32 %v2519, %v2736
        %v2830 = vmul.f32 %v2524, %v2738
        %v2831 = vmul.f32 %v2529, %v2740
        %v2832 = vmul.f32 %v2534, %v2742
        %v2833 = vmul.f32 %v2539, %v2744
        %v2834 = vmul.f32 %v2544, %v2746
        %v2835 = vmul.f32 %v2549, %v2748
        %v2836 = vmul.f32 %v2554, %v2750
        %v2837 = vmul.f32 %v2559, %v2752
        %v2838 = vmul.f32 %v2564, %v2754
        %v2839 = vmul.f32 %v2569, %v2756
        %v2840 = vmul.f32 %v2574, %v2758
        %v2841 = vmul.f32 %v2579, %v2760
        %v2842 = vmul.f32 %v2584, %v2762
        %v2843 = vmul.f32 %v2589, %v2764
        %v2844 = vmul.f32 %v2594, %v2766
        %v2845 = vmul.f32 %v2599, %v2768
        %v2846 = vmul.f32 %v2604, %v2770
        %v2847 = vmul.f32 %v2609, %v2772
        %v2848 = vmul.f32 %v2614, %v2774
        %v2849 = vmul.f32 %v2619, %v2776
        %v2850 = vmul.f32 %v2624, %v2778
        %v2851 = vmul.f32 %v2629, %v2780
        %v2852 = vmul.f32 %v2634, %v2782
        %v2853 = vmul.f32 %v2639, %v2784
        %v2854 = vmul.f32 %v2644, %v2786
        %v2855 = vmul.f32 %v2649, %v2788
        %v2856 = vmul.f32 %v2654, %v2790
        %v2857 = vmul.f32 %v2659, %v2792
        %v2858 = vmul.f32 %v2664, %v2794
        %2859 = vst.msk [vmem:[%s256] sm:$0xff] %vm486, %v2795
        %2860 = vst.msk [vmem:[%s256 + $0x8] sm:$0xff] %vm486, %v2796
        %2861 = vst.msk [vmem:[%s256 + $0x10] sm:$0xff] %vm486, %v2797
        %2862 = vst.msk [vmem:[%s256 + $0x18] sm:$0xff] %vm486, %v2798
        %2863 = vst.msk [vmem:[%s256 + $0x20] sm:$0xff] %vm486, %v2799
        %2864 = vst.msk [vmem:[%s256 + $0x28] sm:$0xff] %vm486, %v2800
        %2865 = vst.msk [vmem:[%s256 + $0x30] sm:$0xff] %vm486, %v2801
        %2866 = vst.msk [vmem:[%s256 + $0x38] sm:$0xff] %vm486, %v2802
        %2867 = vst.msk [vmem:[%s256 + $0x40] sm:$0xff] %vm486, %v2803
        %2868 = vst.msk [vmem:[%s256 + $0x48] sm:$0xff] %vm486, %v2804
        %2869 = vst.msk [vmem:[%s256 + $0x50] sm:$0xff] %vm486, %v2805
        %2870 = vst.msk [vmem:[%s256 + $0x58] sm:$0xff] %vm486, %v2806
        %2871 = vst.msk [vmem:[%s256 + $0x60] sm:$0xff] %vm486, %v2807
        %2872 = vst.msk [vmem:[%s256 + $0x68] sm:$0xff] %vm486, %v2808
        %2873 = vst.msk [vmem:[%s256 + $0x70] sm:$0xff] %vm486, %v2809
        %2874 = vst.msk [vmem:[%s256 + $0x78] sm:$0xff] %vm486, %v2810
        %2875 = vst.msk [vmem:[%s256 + $0x80] sm:$0xff] %vm486, %v2811
        %2876 = vst.msk [vmem:[%s256 + $0x88] sm:$0xff] %vm486, %v2812
        %2877 = vst.msk [vmem:[%s256 + $0x90] sm:$0xff] %vm486, %v2813
        %2878 = vst.msk [vmem:[%s256 + $0x98] sm:$0xff] %vm486, %v2814
        %2879 = vst.msk [vmem:[%s256 + $0xa0] sm:$0xff] %vm486, %v2815
        %2880 = vst.msk [vmem:[%s256 + $0xa8] sm:$0xff] %vm486, %v2816
        %2881 = vst.msk [vmem:[%s256 + $0xb0] sm:$0xff] %vm486, %v2817
        %2882 = vst.msk [vmem:[%s256 + $0xb8] sm:$0xff] %vm486, %v2818
        %2883 = vst.msk [vmem:[%s256 + $0xc0] sm:$0xff] %vm486, %v2819
        %2884 = vst.msk [vmem:[%s256 + $0xc8] sm:$0xff] %vm486, %v2820
        %2885 = vst.msk [vmem:[%s256 + $0xd0] sm:$0xff] %vm486, %v2821
        %2886 = vst.msk [vmem:[%s256 + $0xd8] sm:$0xff] %vm486, %v2822
        %2887 = vst.msk [vmem:[%s256 + $0xe0] sm:$0xff] %vm486, %v2823
        %2888 = vst.msk [vmem:[%s256 + $0xe8] sm:$0xff] %vm486, %v2824
        %2889 = vst.msk [vmem:[%s256 + $0xf0] sm:$0xff] %vm486, %v2825
        %2890 = vst.msk [vmem:[%s256 + $0xf8] sm:$0xff] %vm486, %v2826
        %2923 = vrot.lane.b32.xlu0 %v2827, 64
        %v2924 = vpop.permute.xlu0 %2923
        %2925 = vrot.lane.b32.xlu0 %v2828, 64
        %v2926 = vpop.permute.xlu0 %2925
        %2927 = vrot.lane.b32.xlu0 %v2829, 64
        %v2928 = vpop.permute.xlu0 %2927
        %2929 = vrot.lane.b32.xlu0 %v2830, 64
        %v2930 = vpop.permute.xlu0 %2929
        %2931 = vrot.lane.b32.xlu0 %v2831, 64
        %v2932 = vpop.permute.xlu0 %2931
        %2933 = vrot.lane.b32.xlu0 %v2832, 64
        %v2934 = vpop.permute.xlu0 %2933
        %2935 = vrot.lane.b32.xlu0 %v2833, 64
        %v2936 = vpop.permute.xlu0 %2935
        %2937 = vrot.lane.b32.xlu0 %v2834, 64
        %v2938 = vpop.permute.xlu0 %2937
        %2939 = vrot.lane.b32.xlu0 %v2835, 64
        %v2940 = vpop.permute.xlu0 %2939
        %2941 = vrot.lane.b32.xlu0 %v2836, 64
        %v2942 = vpop.permute.xlu0 %2941
        %2943 = vrot.lane.b32.xlu0 %v2837, 64
        %v2944 = vpop.permute.xlu0 %2943
        %2945 = vrot.lane.b32.xlu0 %v2838, 64
        %v2946 = vpop.permute.xlu0 %2945
        %2947 = vrot.lane.b32.xlu0 %v2839, 64
        %v2948 = vpop.permute.xlu0 %2947
        %2949 = vrot.lane.b32.xlu0 %v2840, 64
        %v2950 = vpop.permute.xlu0 %2949
        %2951 = vrot.lane.b32.xlu0 %v2841, 64
        %v2952 = vpop.permute.xlu0 %2951
        %2953 = vrot.lane.b32.xlu0 %v2842, 64
        %v2954 = vpop.permute.xlu0 %2953
        %2955 = vrot.lane.b32.xlu0 %v2843, 64
        %v2956 = vpop.permute.xlu0 %2955
        %2957 = vrot.lane.b32.xlu0 %v2844, 64
        %v2958 = vpop.permute.xlu0 %2957
        %2959 = vrot.lane.b32.xlu0 %v2845, 64
        %v2960 = vpop.permute.xlu0 %2959
        %2961 = vrot.lane.b32.xlu0 %v2846, 64
        %v2962 = vpop.permute.xlu0 %2961
        %2963 = vrot.lane.b32.xlu0 %v2847, 64
        %v2964 = vpop.permute.xlu0 %2963
        %2965 = vrot.lane.b32.xlu0 %v2848, 64
        %v2966 = vpop.permute.xlu0 %2965
        %2967 = vrot.lane.b32.xlu0 %v2849, 64
        %v2968 = vpop.permute.xlu0 %2967
        %2969 = vrot.lane.b32.xlu0 %v2850, 64
        %v2970 = vpop.permute.xlu0 %2969
        %2971 = vrot.lane.b32.xlu0 %v2851, 64
        %v2972 = vpop.permute.xlu0 %2971
        %2973 = vrot.lane.b32.xlu0 %v2852, 64
        %v2974 = vpop.permute.xlu0 %2973
        %2975 = vrot.lane.b32.xlu0 %v2853, 64
        %v2976 = vpop.permute.xlu0 %2975
        %2977 = vrot.lane.b32.xlu0 %v2854, 64
        %v2978 = vpop.permute.xlu0 %2977
        %2979 = vrot.lane.b32.xlu0 %v2855, 64
        %v2980 = vpop.permute.xlu0 %2979
        %2981 = vrot.lane.b32.xlu0 %v2856, 64
        %v2982 = vpop.permute.xlu0 %2981
        %2983 = vrot.lane.b32.xlu0 %v2857, 64
        %v2984 = vpop.permute.xlu0 %2983
        %2985 = vrot.lane.b32.xlu0 %v2858, 64
        %v2986 = vpop.permute.xlu0 %2985
        %vm3019 = vcmask 1048064
        %3020 = vst.msk [vmem:[%s256] sm:$0xff] %vm3019, %v2924
        %3021 = vst.msk [vmem:[%s256 + $0x8] sm:$0xff] %vm3019, %v2926
        %3022 = vst.msk [vmem:[%s256 + $0x10] sm:$0xff] %vm3019, %v2928
        %3023 = vst.msk [vmem:[%s256 + $0x18] sm:$0xff] %vm3019, %v2930
        %3024 = vst.msk [vmem:[%s256 + $0x20] sm:$0xff] %vm3019, %v2932
        %3025 = vst.msk [vmem:[%s256 + $0x28] sm:$0xff] %vm3019, %v2934
        %3026 = vst.msk [vmem:[%s256 + $0x30] sm:$0xff] %vm3019, %v2936
        %3027 = vst.msk [vmem:[%s256 + $0x38] sm:$0xff] %vm3019, %v2938
        %3028 = vst.msk [vmem:[%s256 + $0x40] sm:$0xff] %vm3019, %v2940
        %3029 = vst.msk [vmem:[%s256 + $0x48] sm:$0xff] %vm3019, %v2942
        %3030 = vst.msk [vmem:[%s256 + $0x50] sm:$0xff] %vm3019, %v2944
        %3031 = vst.msk [vmem:[%s256 + $0x58] sm:$0xff] %vm3019, %v2946
        %3032 = vst.msk [vmem:[%s256 + $0x60] sm:$0xff] %vm3019, %v2948
        %3033 = vst.msk [vmem:[%s256 + $0x68] sm:$0xff] %vm3019, %v2950
        %3034 = vst.msk [vmem:[%s256 + $0x70] sm:$0xff] %vm3019, %v2952
        %3035 = vst.msk [vmem:[%s256 + $0x78] sm:$0xff] %vm3019, %v2954
        %3036 = vst.msk [vmem:[%s256 + $0x80] sm:$0xff] %vm3019, %v2956
        %3037 = vst.msk [vmem:[%s256 + $0x88] sm:$0xff] %vm3019, %v2958
        %3038 = vst.msk [vmem:[%s256 + $0x90] sm:$0xff] %vm3019, %v2960
        %3039 = vst.msk [vmem:[%s256 + $0x98] sm:$0xff] %vm3019, %v2962
        %3040 = vst.msk [vmem:[%s256 + $0xa0] sm:$0xff] %vm3019, %v2964
        %3041 = vst.msk [vmem:[%s256 + $0xa8] sm:$0xff] %vm3019, %v2966
        %3042 = vst.msk [vmem:[%s256 + $0xb0] sm:$0xff] %vm3019, %v2968
        %3043 = vst.msk [vmem:[%s256 + $0xb8] sm:$0xff] %vm3019, %v2970
        %3044 = vst.msk [vmem:[%s256 + $0xc0] sm:$0xff] %vm3019, %v2972
        %3045 = vst.msk [vmem:[%s256 + $0xc8] sm:$0xff] %vm3019, %v2974
        %3046 = vst.msk [vmem:[%s256 + $0xd0] sm:$0xff] %vm3019, %v2976
        %3047 = vst.msk [vmem:[%s256 + $0xd8] sm:$0xff] %vm3019, %v2978
        %3048 = vst.msk [vmem:[%s256 + $0xe0] sm:$0xff] %vm3019, %v2980
        %3049 = vst.msk [vmem:[%s256 + $0xe8] sm:$0xff] %vm3019, %v2982
        %3050 = vst.msk [vmem:[%s256 + $0xf0] sm:$0xff] %vm3019, %v2984
        %3051 = vst.msk [vmem:[%s256 + $0xf8] sm:$0xff] %vm3019, %v2986
        %s3052 = sand.u32 %s130, 1
        %s3053 = scalar_lea.sflag [#allocation3], %s3052
        %s3054 = sand.u32 %s130, 1
        %s3055 = smul.addr %s3054, 256
        %s3056 = scalar_lea.vmem [#allocation2], %s3055
        // Predicated region
        $region33: #{tpu_custom_call.1} parent=31 // pred_check
          %p3057 = pneg %p140
        $region34: #{tpu_custom_call.1} parent=31 // pred_check_branch
          %3059 = sbr.rel (%p3057) target = $region36
        $region35: #{tpu_custom_call.1} parent=31 // pred_region
          %s3060 = smul.u32 32, %s23
          %s3062 = ssub.s32 4096, 4096
          %3063 = vsyncadd %s3053, %s3062
          %s3064 = smul.addr %s22, 32
          %s3065 = sadd.s32 %s3060, %s3064
          %s3066 = smul.addr %s3065, 128
          %s3067 = scalar_lea.hbm %s3, %s3066
          %s3068 = sshll.u32 %s3056, 4
          %s3069 = int_to_ptr.vmem [resolvable:$true] %s3068
          %3074 = dma.vmem_to_hbm [thread:$0]  %s3069, 4096, %s3067, %s3053, 128, 128, 8
        $region36: #{tpu_custom_call.1} parent=31 // pred_fallthru
          _
      $region32: #{tpu_custom_call.1} parent=5 // pred_fallthru
        _
      %p3075 = scmp.le.s32.totalorder 2, %s12
      // Predicated region
      $region37: #{tpu_custom_call.1} parent=5 // pred_check
        %p3076 = pneg %p3075
      $region38: #{tpu_custom_call.1} parent=5 // pred_check_branch
        %3078 = sbr.rel (%p3076) target = $region40
      $region39: #{tpu_custom_call.1} parent=5 // pred_region
        %s3079 = ssub.s32 %s12, 2
        // Predicated region
        $region41: #{tpu_custom_call.1} parent=39 // pred_check
          %p3080 = pneg %p146
        $region42: #{tpu_custom_call.1} parent=39 // pred_check_branch
          %3082 = sbr.rel (%p3080) target = $region44
        $region43: #{tpu_custom_call.1} parent=39 // pred_region
          %s3083 = sand.u32 %s131, 1
          %s3084 = scalar_lea.sflag [#allocation3], %s3083
          %s3085 = sand.u32 %s131, 1
          %s3086 = smul.addr %s3085, 256
          %s3087 = scalar_lea.vmem [#allocation2], %s3086
          %3088 = dma.done %s3084, 4096
        $region44: #{tpu_custom_call.1} parent=39 // pred_fallthru
          _
      $region40: #{tpu_custom_call.1} parent=5 // pred_fallthru
        _
    $region6: #{tpu_custom_call.1} parent=1 // loop_footer
      %s16 = sadd.s32 1, %s12
    $region7: #{tpu_custom_call.1} parent=1 // loop_footer_branch
      %11 = sbr.rel target = $region3
    $region8: #{tpu_custom_call.1} parent=1 // loop_exit
      _
    %3089 = vsyncpa [#allocation3], 1
    %s3090 = scalar_lea.sflag [#allocation3], 1
    %3091 = vsyncpa %s3090, 1

</llo_original>
